<compile_context>
chip_gen: v6e
topology: v6e:2x2x1
jax: 0.10.0
libtpu: 0.0.40
codegen_flags: <defaults>
</compile_context>

<pallas_src>
import functools
import math

import jax
import jax.numpy as jnp
from jax import lax
from jax.experimental import pallas as pl
from jax.experimental.pallas import tpu as pltpu


# ------------------------------ Pallas kernel -------------------------------

def _embeddings_kernel(wid_ref,                    # SMEM: prefetched word ids [n_total]
                       pid_ref, tid_ref,           # VMEM: (tile, 1) int32 id blocks
                       word_hbm,                   # HBM: word table (V, H)
                       pos_ref, tt_ref,            # VMEM-resident tables (P, H) / (T, H)
                       gamma_ref, beta_ref,        # VMEM: (1, H)
                       out_ref,                    # VMEM: (tile, H)
                       wbuf, sems,                 # scratch: (2*tile, H), DMA sems (2,)
                       *, tile, eps):
    o = pl.program_id(0)
    j = pl.program_id(1)
    n_inner = pl.num_programs(1)
    t_cur = o * n_inner + j                        # linear row-tile index

    # --- word-row gather: issue all `tile` row DMAs for one tile into a slot.
    def issue_word_gather(tile_idx, slot):
        base = tile_idx * tile
        dst0 = slot * tile

        def body(r, carry):
            pltpu.make_async_copy(
                word_hbm.at[pl.ds(wid_ref[base + r], 1)],
                wbuf.at[pl.ds(dst0 + r, 1)],
                sems.at[slot],
            ).start()
            return carry

        lax.fori_loop(0, tile, body, 0, unroll=min(tile, 8))

    # Prime this outer-row's first tile (first inner step only).
    @pl.when(j == 0)
    def _prime():
        issue_word_gather(t_cur, 0)

    # Prefetch the next tile's word rows into the other slot (double buffer),
    # issued BEFORE waiting on the current slot so the DMAs overlap compute.
    @pl.when(j + 1 < n_inner)
    def _prefetch_next():
        issue_word_gather(t_cur + 1, (j + 1) % 2)

    # Single aggregate wait: a descriptor covering the whole slot buffer waits
    # for the sum of all per-row copies that signalled this slot's semaphore.
    slot = j % 2
    row0 = pl.multiple_of(slot * tile, 8)
    cur_slot = wbuf.at[pl.ds(row0, tile)]
    pltpu.make_async_copy(cur_slot, cur_slot, sems.at[slot]).wait()

    # ----- embedding sum (accumulate in f32) -----
    w = wbuf[pl.ds(row0, tile), :].astype(jnp.float32)          # (tile, H)

    # Position embedding: one-hot (tile, P) @ (P, H) on the (otherwise idle) MXU.
    pid = pid_ref[...]                                          # (tile, 1) int32
    n_pos = pos_ref.shape[0]
    pos_onehot = (lax.broadcasted_iota(jnp.int32, (tile, n_pos), 1)
                  == pid).astype(pos_ref.dtype)
    p = jnp.dot(pos_onehot, pos_ref[...],
                preferred_element_type=jnp.float32)             # (tile, H)

    # Token-type embedding: 2-row table -> VPU select; generic -> one-hot matmul.
    tid = tid_ref[...]                                          # (tile, 1) int32
    n_tt = tt_ref.shape[0]
    if n_tt == 2:
        t = jnp.where(tid == 0, tt_ref[0:1, :], tt_ref[1:2, :]).astype(jnp.float32)
    else:
        tt_onehot = (lax.broadcasted_iota(jnp.int32, (tile, n_tt), 1)
                     == tid).astype(tt_ref.dtype)
        t = jnp.dot(tt_onehot, tt_ref[...], preferred_element_type=jnp.float32)

    e = w + p + t                                               # (tile, H) f32

    # ----- LayerNorm (TF-style, eps = 1e-5), f32 statistics -----
    mean = jnp.mean(e, axis=-1, keepdims=True)
    c = e - mean
    var = jnp.mean(c * c, axis=-1, keepdims=True)
    x = c * lax.rsqrt(var + eps)
    y = x * gamma_ref[...].astype(jnp.float32) + beta_ref[...].astype(jnp.float32)

    # Dropout is identity at inference.
    out_ref[...] = y.astype(out_ref.dtype)


# -------------------------------- Wrapper ------------------------------------

def bert_embeddings_forward(input_ids, token_type_ids=None, position_ids=None, *,
                            word_emb, pos_emb, tt_emb, gamma, beta,
                            eps=1e-5, tile=256):
    """BertEmbeddings.forward (num_pos_emb == 1, segment embeddings present)."""
    B, S = input_ids.shape
    H = word_emb.shape[1]

    if position_ids is None:
        position_ids = jnp.broadcast_to(
            jnp.arange(S, dtype=jnp.int32)[None, :], (B, S))
    if token_type_ids is None:
        token_type_ids = jnp.zeros((B, S), jnp.int32)

    N = B * S
    # Row tile: sublane-aligned, clamped to the problem size.
    tile = max(8, min(int(tile), ((N + 7) // 8) * 8))
    tile = ((tile + 7) // 8) * 8
    n_tiles = math.ceil(N / tile)
    n_outer = 2 if n_tiles >= 2 else 1      # "parallel" axis (2 TCs on v7x)
    n_inner = math.ceil(n_tiles / n_outer)  # "arbitrary" axis (double-buffered)
    n_total = n_outer * n_inner * tile
    pad = n_total - N

    wid = jnp.pad(input_ids.reshape(N).astype(jnp.int32), (0, pad))
    pid = jnp.pad(position_ids.reshape(N).astype(jnp.int32), (0, pad)).reshape(n_total, 1)
    tid = jnp.pad(token_type_ids.reshape(N).astype(jnp.int32), (0, pad)).reshape(n_total, 1)

    kernel = functools.partial(_embeddings_kernel, tile=tile, eps=eps)

    tile_map = lambda o, j, wid_ref: (o * n_inner + j, 0)
    const_map = lambda o, j, wid_ref: (0, 0)

    out = pl.pallas_call(
        kernel,
        out_shape=jax.ShapeDtypeStruct((n_total, H), word_emb.dtype),
        grid_spec=pltpu.PrefetchScalarGridSpec(
            num_scalar_prefetch=1,                        # word ids -> SMEM (drive DMAs)
            grid=(n_outer, n_inner),
            in_specs=[
                pl.BlockSpec((tile, 1), tile_map),        # position ids (per tile)
                pl.BlockSpec((tile, 1), tile_map),        # token-type ids (per tile)
                pl.BlockSpec(memory_space=pl.ANY),        # word table stays in HBM
                pl.BlockSpec(pos_emb.shape, const_map),   # position table, VMEM resident
                pl.BlockSpec(tt_emb.shape, const_map),    # token-type table, VMEM resident
                pl.BlockSpec((1, H), const_map),          # LN gamma
                pl.BlockSpec((1, H), const_map),          # LN beta
            ],
            out_specs=pl.BlockSpec((tile, H), tile_map),  # full-H, lane-dense stores
            scratch_shapes=[
                pltpu.VMEM((2 * tile, H), word_emb.dtype),  # double-buffered word rows
                pltpu.SemaphoreType.DMA((2,)),              # one DMA sem per slot
            ],
        ),
        compiler_params=pltpu.CompilerParams(
            dimension_semantics=("parallel", "arbitrary"),
            vmem_limit_bytes=48 * 1024 * 1024,
        ),
    )(wid, pid, tid, word_emb, pos_emb, tt_emb,
      gamma.reshape(1, H), beta.reshape(1, H))

    return out[:N].reshape(B, S, H)


# ---------------------------------- main --------------------------------------

if __name__ == "__main__":
    B, S, H = 2, 16, 128            # hidden multiple of 128 -> lane-dense tiles
    VOCAB, MAX_POS, TYPE_VOCAB = 256, 64, 2

    root = jax.random.PRNGKey(0)
    k_ids, k_tt, k_w, k_p, k_t, k_g, k_b = jax.random.split(root, 7)

    input_ids = jax.random.randint(k_ids, (B, S), 0, VOCAB, dtype=jnp.int32)
    token_type_ids = jax.random.randint(k_tt, (B, S), 0, TYPE_VOCAB, dtype=jnp.int32)

    word_emb = 0.02 * jax.random.normal(k_w, (VOCAB, H), jnp.float32)
    pos_emb = 0.02 * jax.random.normal(k_p, (MAX_POS, H), jnp.float32)
    tt_emb = 0.02 * jax.random.normal(k_t, (TYPE_VOCAB, H), jnp.float32)
    gamma = 1.0 + 0.1 * jax.random.normal(k_g, (H,), jnp.float32)
    beta = 0.1 * jax.random.normal(k_b, (H,), jnp.float32)

    # Small tile here to exercise priming + prefetch + both grid axes
    # (N=32 rows -> 4 tiles -> grid (2, 2)).  Realistic runs use tile=256.
    out = bert_embeddings_forward(
        input_ids, token_type_ids=token_type_ids, position_ids=None,
        word_emb=word_emb, pos_emb=pos_emb, tt_emb=tt_emb,
        gamma=gamma, beta=beta, eps=1e-5, tile=8)
    jax.block_until_ready(out)
    assert out.shape == (B, S, H)

    # Pure-JAX reference (same math as the PyTorch module at inference).
    pos_ids = jnp.broadcast_to(jnp.arange(S, dtype=jnp.int32)[None, :], (B, S))
    e = word_emb[input_ids] + pos_emb[pos_ids] + tt_emb[token_type_ids]
    mu = e.mean(-1, keepdims=True)
    var = ((e - mu) ** 2).mean(-1, keepdims=True)
    ref = (e - mu) / jnp.sqrt(var + 1e-5) * gamma + beta

    max_err = float(jnp.max(jnp.abs(out - ref)))
    assert max_err < 1e-3, f"mismatch vs reference: {max_err}"

    print("KERNEL_OK")
</pallas_src>

<mosaic_0001>
module attributes {stable_mosaic.version = 11 : i64} {
  func.func @_embeddings_kernel(%arg0: i32, %arg1: i32, %arg2: memref<32xi32, #tpu.memory_space<smem>>, %arg3: memref<8x1xi32, #tpu.memory_space<vmem>>, %arg4: memref<8x1xi32, #tpu.memory_space<vmem>>, %arg5: memref<256x128xf32, #tpu.memory_space<any>>, %arg6: memref<64x128xf32, #tpu.memory_space<vmem>>, %arg7: memref<2x128xf32, #tpu.memory_space<vmem>>, %arg8: memref<1x128xf32, #tpu.memory_space<vmem>>, %arg9: memref<1x128xf32, #tpu.memory_space<vmem>>, %arg10: memref<8x128xf32, #tpu.memory_space<vmem>>, %arg11: memref<16x128xf32, #tpu.memory_space<vmem>>, %arg12: memref<2x!tpu.dma_semaphore, #tpu.memory_space<semaphore_mem>>) attributes {dimension_semantics = [#tpu.dimension_semantics<parallel>, #tpu.dimension_semantics<arbitrary>], iteration_bounds = array<i64: 2, 2>, scalar_prefetch = 1 : i64, scratch_operands = 2 : i64, tpu.core_type = #tpu.core_type<tc>, window_params = [{transform_indices = @transform_0, window_bounds = array<i64: 8, 1>}, {transform_indices = @transform_1, window_bounds = array<i64: 8, 1>}, {}, {pipeline_mode = #tpu.pipeline_mode<synchronous>, transform_indices = @transform_3, window_bounds = array<i64: 64, 128>}, {pipeline_mode = #tpu.pipeline_mode<synchronous>, transform_indices = @transform_4, window_bounds = array<i64: 2, 128>}, {pipeline_mode = #tpu.pipeline_mode<synchronous>, transform_indices = @transform_5, window_bounds = array<i64: 1, 128>}, {pipeline_mode = #tpu.pipeline_mode<synchronous>, transform_indices = @transform_6, window_bounds = array<i64: 1, 128>}, {transform_indices = @transform_7, window_bounds = array<i64: 8, 128>}]} {
    %c2_i32 = arith.constant 2 : i32
    %0 = arith.muli %arg0, %c2_i32 : i32
    %1 = arith.addi %0, %arg1 : i32
    %c0_i32 = arith.constant 0 : i32
    %2 = arith.cmpi eq, %arg1, %c0_i32 : i32
    %3 = arith.extui %2 : i1 to i32
    %c0_i32_0 = arith.constant 0 : i32
    %4 = arith.cmpi ne, %3, %c0_i32_0 : i32
    scf.if %4 {
      %c8_i32_32 = arith.constant 8 : i32
      %72 = arith.muli %1, %c8_i32_32 : i32
      %c0_i32_33 = arith.constant 0 : i32
      %73 = arith.addi %72, %c0_i32_33 : i32
      %74 = arith.index_cast %73 : i32 to index
      %75 = memref.load %arg2[%74] : memref<32xi32, #tpu.memory_space<smem>>
      %c0_i32_34 = arith.constant 0 : i32
      %76 = arith.addi %c0_i32_34, %c0_i32_33 : i32
      %c0_i32_35 = arith.constant 0 : i32
      %c0_i32_36 = arith.constant 0 : i32
      %77 = tpu.memref_slice %arg5[%75, %c0_i32_36] : memref<256x128xf32, #tpu.memory_space<any>> -> memref<1x128xf32, #tpu.memory_space<any>>
      %c0_i32_37 = arith.constant 0 : i32
      %78 = tpu.memref_slice %arg11[%76, %c0_i32_37] : memref<16x128xf32, #tpu.memory_space<vmem>> -> memref<1x128xf32, #tpu.memory_space<vmem>>
      %79 = tpu.memref_slice %arg12[%c0_i32_35] : memref<2x!tpu.dma_semaphore, #tpu.memory_space<semaphore_mem>> -> memref<1x!tpu.dma_semaphore, #tpu.memory_space<semaphore_mem>>
      %80 = tpu.memref_squeeze %79 : memref<1x!tpu.dma_semaphore, #tpu.memory_space<semaphore_mem>> -> memref<!tpu.dma_semaphore, #tpu.memory_space<semaphore_mem>>
      tpu.enqueue_dma source(%77 : memref<1x128xf32, #tpu.memory_space<any>>) target(%78 : memref<1x128xf32, #tpu.memory_space<vmem>>) target_semaphore(%80 : memref<!tpu.dma_semaphore, #tpu.memory_space<semaphore_mem>>)
      %c1_i32_38 = arith.constant 1 : i32
      %81 = arith.addi %72, %c1_i32_38 : i32
      %82 = arith.index_cast %81 : i32 to index
      %83 = memref.load %arg2[%82] : memref<32xi32, #tpu.memory_space<smem>>
      %c0_i32_39 = arith.constant 0 : i32
      %84 = arith.addi %c0_i32_39, %c1_i32_38 : i32
      %c0_i32_40 = arith.constant 0 : i32
      %c0_i32_41 = arith.constant 0 : i32
      %85 = tpu.memref_slice %arg5[%83, %c0_i32_41] : memref<256x128xf32, #tpu.memory_space<any>> -> memref<1x128xf32, #tpu.memory_space<any>>
      %c0_i32_42 = arith.constant 0 : i32
      %86 = tpu.memref_slice %arg11[%84, %c0_i32_42] : memref<16x128xf32, #tpu.memory_space<vmem>> -> memref<1x128xf32, #tpu.memory_space<vmem>>
      %87 = tpu.memref_slice %arg12[%c0_i32_40] : memref<2x!tpu.dma_semaphore, #tpu.memory_space<semaphore_mem>> -> memref<1x!tpu.dma_semaphore, #tpu.memory_space<semaphore_mem>>
      %88 = tpu.memref_squeeze %87 : memref<1x!tpu.dma_semaphore, #tpu.memory_space<semaphore_mem>> -> memref<!tpu.dma_semaphore, #tpu.memory_space<semaphore_mem>>
      tpu.enqueue_dma source(%85 : memref<1x128xf32, #tpu.memory_space<any>>) target(%86 : memref<1x128xf32, #tpu.memory_space<vmem>>) target_semaphore(%88 : memref<!tpu.dma_semaphore, #tpu.memory_space<semaphore_mem>>)
      %c2_i32_43 = arith.constant 2 : i32
      %89 = arith.addi %72, %c2_i32_43 : i32
      %90 = arith.index_cast %89 : i32 to index
      %91 = memref.load %arg2[%90] : memref<32xi32, #tpu.memory_space<smem>>
      %c0_i32_44 = arith.constant 0 : i32
      %92 = arith.addi %c0_i32_44, %c2_i32_43 : i32
      %c0_i32_45 = arith.constant 0 : i32
      %c0_i32_46 = arith.constant 0 : i32
      %93 = tpu.memref_slice %arg5[%91, %c0_i32_46] : memref<256x128xf32, #tpu.memory_space<any>> -> memref<1x128xf32, #tpu.memory_space<any>>
      %c0_i32_47 = arith.constant 0 : i32
      %94 = tpu.memref_slice %arg11[%92, %c0_i32_47] : memref<16x128xf32, #tpu.memory_space<vmem>> -> memref<1x128xf32, #tpu.memory_space<vmem>>
      %95 = tpu.memref_slice %arg12[%c0_i32_45] : memref<2x!tpu.dma_semaphore, #tpu.memory_space<semaphore_mem>> -> memref<1x!tpu.dma_semaphore, #tpu.memory_space<semaphore_mem>>
      %96 = tpu.memref_squeeze %95 : memref<1x!tpu.dma_semaphore, #tpu.memory_space<semaphore_mem>> -> memref<!tpu.dma_semaphore, #tpu.memory_space<semaphore_mem>>
      tpu.enqueue_dma source(%93 : memref<1x128xf32, #tpu.memory_space<any>>) target(%94 : memref<1x128xf32, #tpu.memory_space<vmem>>) target_semaphore(%96 : memref<!tpu.dma_semaphore, #tpu.memory_space<semaphore_mem>>)
      %c3_i32 = arith.constant 3 : i32
      %97 = arith.addi %72, %c3_i32 : i32
      %98 = arith.index_cast %97 : i32 to index
      %99 = memref.load %arg2[%98] : memref<32xi32, #tpu.memory_space<smem>>
      %c0_i32_48 = arith.constant 0 : i32
      %100 = arith.addi %c0_i32_48, %c3_i32 : i32
      %c0_i32_49 = arith.constant 0 : i32
      %c0_i32_50 = arith.constant 0 : i32
      %101 = tpu.memref_slice %arg5[%99, %c0_i32_50] : memref<256x128xf32, #tpu.memory_space<any>> -> memref<1x128xf32, #tpu.memory_space<any>>
      %c0_i32_51 = arith.constant 0 : i32
      %102 = tpu.memref_slice %arg11[%100, %c0_i32_51] : memref<16x128xf32, #tpu.memory_space<vmem>> -> memref<1x128xf32, #tpu.memory_space<vmem>>
      %103 = tpu.memref_slice %arg12[%c0_i32_49] : memref<2x!tpu.dma_semaphore, #tpu.memory_space<semaphore_mem>> -> memref<1x!tpu.dma_semaphore, #tpu.memory_space<semaphore_mem>>
      %104 = tpu.memref_squeeze %103 : memref<1x!tpu.dma_semaphore, #tpu.memory_space<semaphore_mem>> -> memref<!tpu.dma_semaphore, #tpu.memory_space<semaphore_mem>>
      tpu.enqueue_dma source(%101 : memref<1x128xf32, #tpu.memory_space<any>>) target(%102 : memref<1x128xf32, #tpu.memory_space<vmem>>) target_semaphore(%104 : memref<!tpu.dma_semaphore, #tpu.memory_space<semaphore_mem>>)
      %c4_i32 = arith.constant 4 : i32
      %105 = arith.addi %72, %c4_i32 : i32
      %106 = arith.index_cast %105 : i32 to index
      %107 = memref.load %arg2[%106] : memref<32xi32, #tpu.memory_space<smem>>
      %c0_i32_52 = arith.constant 0 : i32
      %108 = arith.addi %c0_i32_52, %c4_i32 : i32
      %c0_i32_53 = arith.constant 0 : i32
      %c0_i32_54 = arith.constant 0 : i32
      %109 = tpu.memref_slice %arg5[%107, %c0_i32_54] : memref<256x128xf32, #tpu.memory_space<any>> -> memref<1x128xf32, #tpu.memory_space<any>>
      %c0_i32_55 = arith.constant 0 : i32
      %110 = tpu.memref_slice %arg11[%108, %c0_i32_55] : memref<16x128xf32, #tpu.memory_space<vmem>> -> memref<1x128xf32, #tpu.memory_space<vmem>>
      %111 = tpu.memref_slice %arg12[%c0_i32_53] : memref<2x!tpu.dma_semaphore, #tpu.memory_space<semaphore_mem>> -> memref<1x!tpu.dma_semaphore, #tpu.memory_space<semaphore_mem>>
      %112 = tpu.memref_squeeze %111 : memref<1x!tpu.dma_semaphore, #tpu.memory_space<semaphore_mem>> -> memref<!tpu.dma_semaphore, #tpu.memory_space<semaphore_mem>>
      tpu.enqueue_dma source(%109 : memref<1x128xf32, #tpu.memory_space<any>>) target(%110 : memref<1x128xf32, #tpu.memory_space<vmem>>) target_semaphore(%112 : memref<!tpu.dma_semaphore, #tpu.memory_space<semaphore_mem>>)
      %c5_i32 = arith.constant 5 : i32
      %113 = arith.addi %72, %c5_i32 : i32
      %114 = arith.index_cast %113 : i32 to index
      %115 = memref.load %arg2[%114] : memref<32xi32, #tpu.memory_space<smem>>
      %c0_i32_56 = arith.constant 0 : i32
      %116 = arith.addi %c0_i32_56, %c5_i32 : i32
      %c0_i32_57 = arith.constant 0 : i32
      %c0_i32_58 = arith.constant 0 : i32
      %117 = tpu.memref_slice %arg5[%115, %c0_i32_58] : memref<256x128xf32, #tpu.memory_space<any>> -> memref<1x128xf32, #tpu.memory_space<any>>
      %c0_i32_59 = arith.constant 0 : i32
      %118 = tpu.memref_slice %arg11[%116, %c0_i32_59] : memref<16x128xf32, #tpu.memory_space<vmem>> -> memref<1x128xf32, #tpu.memory_space<vmem>>
      %119 = tpu.memref_slice %arg12[%c0_i32_57] : memref<2x!tpu.dma_semaphore, #tpu.memory_space<semaphore_mem>> -> memref<1x!tpu.dma_semaphore, #tpu.memory_space<semaphore_mem>>
      %120 = tpu.memref_squeeze %119 : memref<1x!tpu.dma_semaphore, #tpu.memory_space<semaphore_mem>> -> memref<!tpu.dma_semaphore, #tpu.memory_space<semaphore_mem>>
      tpu.enqueue_dma source(%117 : memref<1x128xf32, #tpu.memory_space<any>>) target(%118 : memref<1x128xf32, #tpu.memory_space<vmem>>) target_semaphore(%120 : memref<!tpu.dma_semaphore, #tpu.memory_space<semaphore_mem>>)
      %c6_i32 = arith.constant 6 : i32
      %121 = arith.addi %72, %c6_i32 : i32
      %122 = arith.index_cast %121 : i32 to index
      %123 = memref.load %arg2[%122] : memref<32xi32, #tpu.memory_space<smem>>
      %c0_i32_60 = arith.constant 0 : i32
      %124 = arith.addi %c0_i32_60, %c6_i32 : i32
      %c0_i32_61 = arith.constant 0 : i32
      %c0_i32_62 = arith.constant 0 : i32
      %125 = tpu.memref_slice %arg5[%123, %c0_i32_62] : memref<256x128xf32, #tpu.memory_space<any>> -> memref<1x128xf32, #tpu.memory_space<any>>
      %c0_i32_63 = arith.constant 0 : i32
      %126 = tpu.memref_slice %arg11[%124, %c0_i32_63] : memref<16x128xf32, #tpu.memory_space<vmem>> -> memref<1x128xf32, #tpu.memory_space<vmem>>
      %127 = tpu.memref_slice %arg12[%c0_i32_61] : memref<2x!tpu.dma_semaphore, #tpu.memory_space<semaphore_mem>> -> memref<1x!tpu.dma_semaphore, #tpu.memory_space<semaphore_mem>>
      %128 = tpu.memref_squeeze %127 : memref<1x!tpu.dma_semaphore, #tpu.memory_space<semaphore_mem>> -> memref<!tpu.dma_semaphore, #tpu.memory_space<semaphore_mem>>
      tpu.enqueue_dma source(%125 : memref<1x128xf32, #tpu.memory_space<any>>) target(%126 : memref<1x128xf32, #tpu.memory_space<vmem>>) target_semaphore(%128 : memref<!tpu.dma_semaphore, #tpu.memory_space<semaphore_mem>>)
      %c7_i32 = arith.constant 7 : i32
      %129 = arith.addi %72, %c7_i32 : i32
      %130 = arith.index_cast %129 : i32 to index
      %131 = memref.load %arg2[%130] : memref<32xi32, #tpu.memory_space<smem>>
      %c0_i32_64 = arith.constant 0 : i32
      %132 = arith.addi %c0_i32_64, %c7_i32 : i32
      %c0_i32_65 = arith.constant 0 : i32
      %c0_i32_66 = arith.constant 0 : i32
      %133 = tpu.memref_slice %arg5[%131, %c0_i32_66] : memref<256x128xf32, #tpu.memory_space<any>> -> memref<1x128xf32, #tpu.memory_space<any>>
      %c0_i32_67 = arith.constant 0 : i32
      %134 = tpu.memref_slice %arg11[%132, %c0_i32_67] : memref<16x128xf32, #tpu.memory_space<vmem>> -> memref<1x128xf32, #tpu.memory_space<vmem>>
      %135 = tpu.memref_slice %arg12[%c0_i32_65] : memref<2x!tpu.dma_semaphore, #tpu.memory_space<semaphore_mem>> -> memref<1x!tpu.dma_semaphore, #tpu.memory_space<semaphore_mem>>
      %136 = tpu.memref_squeeze %135 : memref<1x!tpu.dma_semaphore, #tpu.memory_space<semaphore_mem>> -> memref<!tpu.dma_semaphore, #tpu.memory_space<semaphore_mem>>
      tpu.enqueue_dma source(%133 : memref<1x128xf32, #tpu.memory_space<any>>) target(%134 : memref<1x128xf32, #tpu.memory_space<vmem>>) target_semaphore(%136 : memref<!tpu.dma_semaphore, #tpu.memory_space<semaphore_mem>>)
      %c8_i32_68 = arith.constant 8 : i32
    } else {
    }
    %c1_i32 = arith.constant 1 : i32
    %5 = arith.addi %arg1, %c1_i32 : i32
    %c2_i32_1 = arith.constant 2 : i32
    %6 = arith.cmpi slt, %5, %c2_i32_1 : i32
    %7 = arith.extui %6 : i1 to i32
    %c0_i32_2 = arith.constant 0 : i32
    %8 = arith.cmpi ne, %7, %c0_i32_2 : i32
    scf.if %8 {
      %c1_i32_32 = arith.constant 1 : i32
      %72 = arith.addi %1, %c1_i32_32 : i32
      %c1_i32_33 = arith.constant 1 : i32
      %73 = arith.addi %arg1, %c1_i32_33 : i32
      %c2_i32_34 = arith.constant 2 : i32
      %c0_i32_35 = arith.constant 0 : i32
      %74 = arith.cmpi eq, %c2_i32_34, %c0_i32_35 : i32
      %c1_i32_36 = arith.constant 1 : i32
      %75 = arith.select %74, %c1_i32_36, %c2_i32_34 : i32
      %76 = arith.remsi %73, %75 : i32
      %c0_i32_37 = arith.constant 0 : i32
      %77 = arith.cmpi ne, %76, %c0_i32_37 : i32
      %c0_i32_38 = arith.constant 0 : i32
      %78 = arith.cmpi slt, %76, %c0_i32_38 : i32
      %c0_i32_39 = arith.constant 0 : i32
      %79 = arith.cmpi slt, %75, %c0_i32_39 : i32
      %80 = arith.xori %78, %79 : i1
      %81 = arith.andi %80, %77 : i1
      %82 = arith.addi %76, %75 : i32
      %83 = arith.select %81, %82, %76 : i32
      %c8_i32_40 = arith.constant 8 : i32
      %84 = arith.muli %72, %c8_i32_40 : i32
      %c8_i32_41 = arith.constant 8 : i32
      %85 = arith.muli %83, %c8_i32_41 : i32
      %c0_i32_42 = arith.constant 0 : i32
      %86 = arith.addi %84, %c0_i32_42 : i32
      %87 = arith.index_cast %86 : i32 to index
      %88 = memref.load %arg2[%87] : memref<32xi32, #tpu.memory_space<smem>>
      %89 = arith.addi %85, %c0_i32_42 : i32
      %c0_i32_43 = arith.constant 0 : i32
      %90 = tpu.memref_slice %arg5[%88, %c0_i32_43] : memref<256x128xf32, #tpu.memory_space<any>> -> memref<1x128xf32, #tpu.memory_space<any>>
      %c0_i32_44 = arith.constant 0 : i32
      %91 = tpu.memref_slice %arg11[%89, %c0_i32_44] : memref<16x128xf32, #tpu.memory_space<vmem>> -> memref<1x128xf32, #tpu.memory_space<vmem>>
      %92 = tpu.memref_slice %arg12[%83] : memref<2x!tpu.dma_semaphore, #tpu.memory_space<semaphore_mem>> -> memref<1x!tpu.dma_semaphore, #tpu.memory_space<semaphore_mem>>
      %93 = tpu.memref_squeeze %92 : memref<1x!tpu.dma_semaphore, #tpu.memory_space<semaphore_mem>> -> memref<!tpu.dma_semaphore, #tpu.memory_space<semaphore_mem>>
      tpu.enqueue_dma source(%90 : memref<1x128xf32, #tpu.memory_space<any>>) target(%91 : memref<1x128xf32, #tpu.memory_space<vmem>>) target_semaphore(%93 : memref<!tpu.dma_semaphore, #tpu.memory_space<semaphore_mem>>)
      %c1_i32_45 = arith.constant 1 : i32
      %94 = arith.addi %84, %c1_i32_45 : i32
      %95 = arith.index_cast %94 : i32 to index
      %96 = memref.load %arg2[%95] : memref<32xi32, #tpu.memory_space<smem>>
      %97 = arith.addi %85, %c1_i32_45 : i32
      %c0_i32_46 = arith.constant 0 : i32
      %98 = tpu.memref_slice %arg5[%96, %c0_i32_46] : memref<256x128xf32, #tpu.memory_space<any>> -> memref<1x128xf32, #tpu.memory_space<any>>
      %c0_i32_47 = arith.constant 0 : i32
      %99 = tpu.memref_slice %arg11[%97, %c0_i32_47] : memref<16x128xf32, #tpu.memory_space<vmem>> -> memref<1x128xf32, #tpu.memory_space<vmem>>
      %100 = tpu.memref_slice %arg12[%83] : memref<2x!tpu.dma_semaphore, #tpu.memory_space<semaphore_mem>> -> memref<1x!tpu.dma_semaphore, #tpu.memory_space<semaphore_mem>>
      %101 = tpu.memref_squeeze %100 : memref<1x!tpu.dma_semaphore, #tpu.memory_space<semaphore_mem>> -> memref<!tpu.dma_semaphore, #tpu.memory_space<semaphore_mem>>
      tpu.enqueue_dma source(%98 : memref<1x128xf32, #tpu.memory_space<any>>) target(%99 : memref<1x128xf32, #tpu.memory_space<vmem>>) target_semaphore(%101 : memref<!tpu.dma_semaphore, #tpu.memory_space<semaphore_mem>>)
      %c2_i32_48 = arith.constant 2 : i32
      %102 = arith.addi %84, %c2_i32_48 : i32
      %103 = arith.index_cast %102 : i32 to index
      %104 = memref.load %arg2[%103] : memref<32xi32, #tpu.memory_space<smem>>
      %105 = arith.addi %85, %c2_i32_48 : i32
      %c0_i32_49 = arith.constant 0 : i32
      %106 = tpu.memref_slice %arg5[%104, %c0_i32_49] : memref<256x128xf32, #tpu.memory_space<any>> -> memref<1x128xf32, #tpu.memory_space<any>>
      %c0_i32_50 = arith.constant 0 : i32
      %107 = tpu.memref_slice %arg11[%105, %c0_i32_50] : memref<16x128xf32, #tpu.memory_space<vmem>> -> memref<1x128xf32, #tpu.memory_space<vmem>>
      %108 = tpu.memref_slice %arg12[%83] : memref<2x!tpu.dma_semaphore, #tpu.memory_space<semaphore_mem>> -> memref<1x!tpu.dma_semaphore, #tpu.memory_space<semaphore_mem>>
      %109 = tpu.memref_squeeze %108 : memref<1x!tpu.dma_semaphore, #tpu.memory_space<semaphore_mem>> -> memref<!tpu.dma_semaphore, #tpu.memory_space<semaphore_mem>>
      tpu.enqueue_dma source(%106 : memref<1x128xf32, #tpu.memory_space<any>>) target(%107 : memref<1x128xf32, #tpu.memory_space<vmem>>) target_semaphore(%109 : memref<!tpu.dma_semaphore, #tpu.memory_space<semaphore_mem>>)
      %c3_i32 = arith.constant 3 : i32
      %110 = arith.addi %84, %c3_i32 : i32
      %111 = arith.index_cast %110 : i32 to index
      %112 = memref.load %arg2[%111] : memref<32xi32, #tpu.memory_space<smem>>
      %113 = arith.addi %85, %c3_i32 : i32
      %c0_i32_51 = arith.constant 0 : i32
      %114 = tpu.memref_slice %arg5[%112, %c0_i32_51] : memref<256x128xf32, #tpu.memory_space<any>> -> memref<1x128xf32, #tpu.memory_space<any>>
      %c0_i32_52 = arith.constant 0 : i32
      %115 = tpu.memref_slice %arg11[%113, %c0_i32_52] : memref<16x128xf32, #tpu.memory_space<vmem>> -> memref<1x128xf32, #tpu.memory_space<vmem>>
      %116 = tpu.memref_slice %arg12[%83] : memref<2x!tpu.dma_semaphore, #tpu.memory_space<semaphore_mem>> -> memref<1x!tpu.dma_semaphore, #tpu.memory_space<semaphore_mem>>
      %117 = tpu.memref_squeeze %116 : memref<1x!tpu.dma_semaphore, #tpu.memory_space<semaphore_mem>> -> memref<!tpu.dma_semaphore, #tpu.memory_space<semaphore_mem>>
      tpu.enqueue_dma source(%114 : memref<1x128xf32, #tpu.memory_space<any>>) target(%115 : memref<1x128xf32, #tpu.memory_space<vmem>>) target_semaphore(%117 : memref<!tpu.dma_semaphore, #tpu.memory_space<semaphore_mem>>)
      %c4_i32 = arith.constant 4 : i32
      %118 = arith.addi %84, %c4_i32 : i32
      %119 = arith.index_cast %118 : i32 to index
      %120 = memref.load %arg2[%119] : memref<32xi32, #tpu.memory_space<smem>>
      %121 = arith.addi %85, %c4_i32 : i32
      %c0_i32_53 = arith.constant 0 : i32
      %122 = tpu.memref_slice %arg5[%120, %c0_i32_53] : memref<256x128xf32, #tpu.memory_space<any>> -> memref<1x128xf32, #tpu.memory_space<any>>
      %c0_i32_54 = arith.constant 0 : i32
      %123 = tpu.memref_slice %arg11[%121, %c0_i32_54] : memref<16x128xf32, #tpu.memory_space<vmem>> -> memref<1x128xf32, #tpu.memory_space<vmem>>
      %124 = tpu.memref_slice %arg12[%83] : memref<2x!tpu.dma_semaphore, #tpu.memory_space<semaphore_mem>> -> memref<1x!tpu.dma_semaphore, #tpu.memory_space<semaphore_mem>>
      %125 = tpu.memref_squeeze %124 : memref<1x!tpu.dma_semaphore, #tpu.memory_space<semaphore_mem>> -> memref<!tpu.dma_semaphore, #tpu.memory_space<semaphore_mem>>
      tpu.enqueue_dma source(%122 : memref<1x128xf32, #tpu.memory_space<any>>) target(%123 : memref<1x128xf32, #tpu.memory_space<vmem>>) target_semaphore(%125 : memref<!tpu.dma_semaphore, #tpu.memory_space<semaphore_mem>>)
      %c5_i32 = arith.constant 5 : i32
      %126 = arith.addi %84, %c5_i32 : i32
      %127 = arith.index_cast %126 : i32 to index
      %128 = memref.load %arg2[%127] : memref<32xi32, #tpu.memory_space<smem>>
      %129 = arith.addi %85, %c5_i32 : i32
      %c0_i32_55 = arith.constant 0 : i32
      %130 = tpu.memref_slice %arg5[%128, %c0_i32_55] : memref<256x128xf32, #tpu.memory_space<any>> -> memref<1x128xf32, #tpu.memory_space<any>>
      %c0_i32_56 = arith.constant 0 : i32
      %131 = tpu.memref_slice %arg11[%129, %c0_i32_56] : memref<16x128xf32, #tpu.memory_space<vmem>> -> memref<1x128xf32, #tpu.memory_space<vmem>>
      %132 = tpu.memref_slice %arg12[%83] : memref<2x!tpu.dma_semaphore, #tpu.memory_space<semaphore_mem>> -> memref<1x!tpu.dma_semaphore, #tpu.memory_space<semaphore_mem>>
      %133 = tpu.memref_squeeze %132 : memref<1x!tpu.dma_semaphore, #tpu.memory_space<semaphore_mem>> -> memref<!tpu.dma_semaphore, #tpu.memory_space<semaphore_mem>>
      tpu.enqueue_dma source(%130 : memref<1x128xf32, #tpu.memory_space<any>>) target(%131 : memref<1x128xf32, #tpu.memory_space<vmem>>) target_semaphore(%133 : memref<!tpu.dma_semaphore, #tpu.memory_space<semaphore_mem>>)
      %c6_i32 = arith.constant 6 : i32
      %134 = arith.addi %84, %c6_i32 : i32
      %135 = arith.index_cast %134 : i32 to index
      %136 = memref.load %arg2[%135] : memref<32xi32, #tpu.memory_space<smem>>
      %137 = arith.addi %85, %c6_i32 : i32
      %c0_i32_57 = arith.constant 0 : i32
      %138 = tpu.memref_slice %arg5[%136, %c0_i32_57] : memref<256x128xf32, #tpu.memory_space<any>> -> memref<1x128xf32, #tpu.memory_space<any>>
      %c0_i32_58 = arith.constant 0 : i32
      %139 = tpu.memref_slice %arg11[%137, %c0_i32_58] : memref<16x128xf32, #tpu.memory_space<vmem>> -> memref<1x128xf32, #tpu.memory_space<vmem>>
      %140 = tpu.memref_slice %arg12[%83] : memref<2x!tpu.dma_semaphore, #tpu.memory_space<semaphore_mem>> -> memref<1x!tpu.dma_semaphore, #tpu.memory_space<semaphore_mem>>
      %141 = tpu.memref_squeeze %140 : memref<1x!tpu.dma_semaphore, #tpu.memory_space<semaphore_mem>> -> memref<!tpu.dma_semaphore, #tpu.memory_space<semaphore_mem>>
      tpu.enqueue_dma source(%138 : memref<1x128xf32, #tpu.memory_space<any>>) target(%139 : memref<1x128xf32, #tpu.memory_space<vmem>>) target_semaphore(%141 : memref<!tpu.dma_semaphore, #tpu.memory_space<semaphore_mem>>)
      %c7_i32 = arith.constant 7 : i32
      %142 = arith.addi %84, %c7_i32 : i32
      %143 = arith.index_cast %142 : i32 to index
      %144 = memref.load %arg2[%143] : memref<32xi32, #tpu.memory_space<smem>>
      %145 = arith.addi %85, %c7_i32 : i32
      %c0_i32_59 = arith.constant 0 : i32
      %146 = tpu.memref_slice %arg5[%144, %c0_i32_59] : memref<256x128xf32, #tpu.memory_space<any>> -> memref<1x128xf32, #tpu.memory_space<any>>
      %c0_i32_60 = arith.constant 0 : i32
      %147 = tpu.memref_slice %arg11[%145, %c0_i32_60] : memref<16x128xf32, #tpu.memory_space<vmem>> -> memref<1x128xf32, #tpu.memory_space<vmem>>
      %148 = tpu.memref_slice %arg12[%83] : memref<2x!tpu.dma_semaphore, #tpu.memory_space<semaphore_mem>> -> memref<1x!tpu.dma_semaphore, #tpu.memory_space<semaphore_mem>>
      %149 = tpu.memref_squeeze %148 : memref<1x!tpu.dma_semaphore, #tpu.memory_space<semaphore_mem>> -> memref<!tpu.dma_semaphore, #tpu.memory_space<semaphore_mem>>
      tpu.enqueue_dma source(%146 : memref<1x128xf32, #tpu.memory_space<any>>) target(%147 : memref<1x128xf32, #tpu.memory_space<vmem>>) target_semaphore(%149 : memref<!tpu.dma_semaphore, #tpu.memory_space<semaphore_mem>>)
      %c8_i32_61 = arith.constant 8 : i32
    } else {
    }
    %c2_i32_3 = arith.constant 2 : i32
    %c0_i32_4 = arith.constant 0 : i32
    %9 = arith.cmpi eq, %c2_i32_3, %c0_i32_4 : i32
    %c1_i32_5 = arith.constant 1 : i32
    %10 = arith.select %9, %c1_i32_5, %c2_i32_3 : i32
    %11 = arith.remsi %arg1, %10 : i32
    %c0_i32_6 = arith.constant 0 : i32
    %12 = arith.cmpi ne, %11, %c0_i32_6 : i32
    %c0_i32_7 = arith.constant 0 : i32
    %13 = arith.cmpi slt, %11, %c0_i32_7 : i32
    %c0_i32_8 = arith.constant 0 : i32
    %14 = arith.cmpi slt, %10, %c0_i32_8 : i32
    %15 = arith.xori %13, %14 : i1
    %16 = arith.andi %15, %12 : i1
    %17 = arith.addi %11, %10 : i32
    %18 = arith.select %16, %17, %11 : i32
    %c8_i32 = arith.constant 8 : i32
    %19 = arith.muli %18, %c8_i32 : i32
    %20 = tpu.assume_multiple %19, 8 : i32
    %c0_i32_9 = arith.constant 0 : i32
    %21 = tpu.memref_slice %arg11[%20, %c0_i32_9] : memref<16x128xf32, #tpu.memory_space<vmem>> -> memref<8x128xf32, #tpu.memory_space<vmem>>
    %c0_i32_10 = arith.constant 0 : i32
    %22 = tpu.memref_slice %arg11[%20, %c0_i32_10] : memref<16x128xf32, #tpu.memory_space<vmem>> -> memref<8x128xf32, #tpu.memory_space<vmem>>
    %23 = tpu.memref_slice %arg12[%18] : memref<2x!tpu.dma_semaphore, #tpu.memory_space<semaphore_mem>> -> memref<1x!tpu.dma_semaphore, #tpu.memory_space<semaphore_mem>>
    %24 = tpu.memref_squeeze %23 : memref<1x!tpu.dma_semaphore, #tpu.memory_space<semaphore_mem>> -> memref<!tpu.dma_semaphore, #tpu.memory_space<semaphore_mem>>
    tpu.wait_dma2 semaphore(%24 : memref<!tpu.dma_semaphore, #tpu.memory_space<semaphore_mem>>) src(%21 : memref<8x128xf32, #tpu.memory_space<vmem>>) dst(%22 : memref<8x128xf32, #tpu.memory_space<vmem>>)
    %25 = arith.index_cast %20 : i32 to index
    %c0 = arith.constant 0 : index
    %26 = vector.load %arg11[%25, %c0] : memref<16x128xf32, #tpu.memory_space<vmem>>, vector<8x128xf32>
    %c0_11 = arith.constant 0 : index
    %c0_12 = arith.constant 0 : index
    %27 = vector.load %arg3[%c0_11, %c0_12] : memref<8x1xi32, #tpu.memory_space<vmem>>, vector<8x1xi32>
    %28 = tpu.iota {dimensions = array<i32: 1>} : vector<8x64xi32>
    %29 = vector.broadcast %27 : vector<8x1xi32> to vector<8x64xi32>
    %30 = arith.cmpi eq, %28, %29 : vector<8x64xi32>
    %31 = arith.extui %30 : vector<8x64xi1> to vector<8x64xi32>
    %32 = arith.sitofp %31 : vector<8x64xi32> to vector<8x64xf32>
    %c0_13 = arith.constant 0 : index
    %c0_14 = arith.constant 0 : index
    %33 = vector.load %arg6[%c0_13, %c0_14] : memref<64x128xf32, #tpu.memory_space<vmem>>, vector<64x128xf32>
    %cst = arith.constant dense<0.000000e+00> : vector<8x128xf32>
    %34 = tpu.matmul %32, %33, %cst {dimension_numbers = #tpu.dot_dimension_numbers<[1], [0], [0], [1], [0, 0, 1, 1], [], []>} : vector<8x64xf32>, vector<64x128xf32>, vector<8x128xf32> -> vector<8x128xf32>
    %c0_15 = arith.constant 0 : index
    %c0_16 = arith.constant 0 : index
    %35 = vector.load %arg4[%c0_15, %c0_16] : memref<8x1xi32, #tpu.memory_space<vmem>>, vector<8x1xi32>
    %c0_i32_17 = arith.constant 0 : i32
    %36 = vector.broadcast %c0_i32_17 : i32 to vector<8x1xi32>
    %37 = arith.cmpi eq, %35, %36 : vector<8x1xi32>
    %c0_18 = arith.constant 0 : index
    %c0_19 = arith.constant 0 : index
    %38 = vector.load %arg7[%c0_18, %c0_19] : memref<2x128xf32, #tpu.memory_space<vmem>>, vector<1x128xf32>
    %c1 = arith.constant 1 : index
    %c0_20 = arith.constant 0 : index
    %39 = vector.load %arg7[%c1, %c0_20] : memref<2x128xf32, #tpu.memory_space<vmem>>, vector<1x128xf32>
    %40 = vector.shape_cast %37 : vector<8x1xi1> to vector<8x1xi1>
    %41 = vector.broadcast %40 : vector<8x1xi1> to vector<8x128xi1>
    %42 = vector.shape_cast %38 : vector<1x128xf32> to vector<1x128xf32>
    %43 = vector.broadcast %42 : vector<1x128xf32> to vector<8x128xf32>
    %44 = vector.shape_cast %39 : vector<1x128xf32> to vector<1x128xf32>
    %45 = vector.broadcast %44 : vector<1x128xf32> to vector<8x128xf32>
    %46 = arith.select %41, %43, %45 : vector<8x128xi1>, vector<8x128xf32>
    %47 = arith.addf %26, %34 : vector<8x128xf32>
    %48 = arith.addf %47, %46 : vector<8x128xf32>
    %cst_21 = arith.constant dense<0.000000e+00> : vector<8xf32>
    %49 = vector.multi_reduction <add>, %48, %cst_21 [1] : vector<8x128xf32> to vector<8xf32>
    %50 = vector.shape_cast %49 : vector<8xf32> to vector<8x1xf32>
    %cst_22 = arith.constant 1.280000e+02 : f32
    %51 = vector.broadcast %cst_22 : f32 to vector<8x1xf32>
    %52 = arith.divf %50, %51 : vector<8x1xf32>
    %53 = vector.broadcast %52 : vector<8x1xf32> to vector<8x128xf32>
    %54 = arith.subf %48, %53 : vector<8x128xf32>
    %55 = arith.mulf %54, %54 : vector<8x128xf32>
    %cst_23 = arith.constant dense<0.000000e+00> : vector<8xf32>
    %56 = vector.multi_reduction <add>, %55, %cst_23 [1] : vector<8x128xf32> to vector<8xf32>
    %57 = vector.shape_cast %56 : vector<8xf32> to vector<8x1xf32>
    %cst_24 = arith.constant 1.280000e+02 : f32
    %58 = vector.broadcast %cst_24 : f32 to vector<8x1xf32>
    %59 = arith.divf %57, %58 : vector<8x1xf32>
    %cst_25 = arith.constant 9.99999974E-6 : f32
    %60 = vector.broadcast %cst_25 : f32 to vector<8x1xf32>
    %61 = arith.addf %59, %60 : vector<8x1xf32>
    %62 = math.rsqrt %61 : vector<8x1xf32>
    %63 = vector.broadcast %62 : vector<8x1xf32> to vector<8x128xf32>
    %64 = arith.mulf %54, %63 : vector<8x128xf32>
    %c0_26 = arith.constant 0 : index
    %c0_27 = arith.constant 0 : index
    %65 = vector.load %arg8[%c0_26, %c0_27] : memref<1x128xf32, #tpu.memory_space<vmem>>, vector<1x128xf32>
    %66 = vector.broadcast %65 : vector<1x128xf32> to vector<8x128xf32>
    %67 = arith.mulf %64, %66 : vector<8x128xf32>
    %c0_28 = arith.constant 0 : index
    %c0_29 = arith.constant 0 : index
    %68 = vector.load %arg9[%c0_28, %c0_29] : memref<1x128xf32, #tpu.memory_space<vmem>>, vector<1x128xf32>
    %69 = vector.broadcast %68 : vector<1x128xf32> to vector<8x128xf32>
    %70 = arith.addf %67, %69 : vector<8x128xf32>
    %c0_30 = arith.constant 0 : index
    %c0_31 = arith.constant 0 : index
    %71 = vector.load %arg10[%c0_30, %c0_31] : memref<8x128xf32, #tpu.memory_space<vmem>>, vector<8x128xf32>
    tpu.vector_store %arg10[%c0_30, %c0_31], %70 {strides = array<i32>} : memref<8x128xf32, #tpu.memory_space<vmem>>, vector<8x128xf32>,
    return
  }
  func.func @transform_0(%arg0: i32, %arg1: i32, %arg2: memref<32xi32, #tpu.memory_space<smem>>) -> (i32, i32) {
    %c2_i32 = arith.constant 2 : i32
    %0 = arith.muli %arg0, %c2_i32 : i32
    %1 = arith.addi %0, %arg1 : i32
    %c0_i32 = arith.constant 0 : i32
    %c0_i32_0 = arith.constant 0 : i32
    return %1, %c0_i32 : i32, i32
  }
  func.func @transform_1(%arg0: i32, %arg1: i32, %arg2: memref<32xi32, #tpu.memory_space<smem>>) -> (i32, i32) {
    %c2_i32 = arith.constant 2 : i32
    %0 = arith.muli %arg0, %c2_i32 : i32
    %1 = arith.addi %0, %arg1 : i32
    %c0_i32 = arith.constant 0 : i32
    %c0_i32_0 = arith.constant 0 : i32
    return %1, %c0_i32 : i32, i32
  }
  func.func @transform_3(%arg0: i32, %arg1: i32, %arg2: memref<32xi32, #tpu.memory_space<smem>>) -> (i32, i32) {
    %c0_i32 = arith.constant 0 : i32
    %c0_i32_0 = arith.constant 0 : i32
    %c0_i32_1 = arith.constant 0 : i32
    return %c0_i32, %c0_i32_0 : i32, i32
  }
  func.func @transform_4(%arg0: i32, %arg1: i32, %arg2: memref<32xi32, #tpu.memory_space<smem>>) -> (i32, i32) {
    %c0_i32 = arith.constant 0 : i32
    %c0_i32_0 = arith.constant 0 : i32
    %c0_i32_1 = arith.constant 0 : i32
    return %c0_i32, %c0_i32_0 : i32, i32
  }
  func.func @transform_5(%arg0: i32, %arg1: i32, %arg2: memref<32xi32, #tpu.memory_space<smem>>) -> (i32, i32) {
    %c0_i32 = arith.constant 0 : i32
    %c0_i32_0 = arith.constant 0 : i32
    %c0_i32_1 = arith.constant 0 : i32
    return %c0_i32, %c0_i32_0 : i32, i32
  }
  func.func @transform_6(%arg0: i32, %arg1: i32, %arg2: memref<32xi32, #tpu.memory_space<smem>>) -> (i32, i32) {
    %c0_i32 = arith.constant 0 : i32
    %c0_i32_0 = arith.constant 0 : i32
    %c0_i32_1 = arith.constant 0 : i32
    return %c0_i32, %c0_i32_0 : i32, i32
  }
  func.func @transform_7(%arg0: i32, %arg1: i32, %arg2: memref<32xi32, #tpu.memory_space<smem>>) -> (i32, i32) {
    %c2_i32 = arith.constant 2 : i32
    %0 = arith.muli %arg0, %c2_i32 : i32
    %1 = arith.addi %0, %arg1 : i32
    %c0_i32 = arith.constant 0 : i32
    %c0_i32_0 = arith.constant 0 : i32
    return %1, %c0_i32 : i32, i32
  }
}

</mosaic_0001>

<llo_original>
// kernel: tpu_custom_call.1
$region0: #{tpu_custom_call.1}
  #allocation0 [shape = 'u32[]', space=smem, size = 0x4, offset = 0x4, fixed_abs, tag = 'smem constant byte address 0x4 - core index']
  #allocation1 [shape = 'u32[144,128]{1,0:T(1,128)}', space=vmem, size = 0x12000, scoped, tag = 'internal scratch']
  #allocation2 [shape = 'f32[16,128]{1,0:T(8,128)}', space=vmem, size = 0x2000, scoped, tag = 'scratch operand']
  #allocation3 [shape = 's32[2]{0}', space=sflag, size = 0x8, scoped, tag = 'scratch operand']
  #allocation4 [shape = 's32[1]{0}', space=sflag, size = 0x4, scoped, tag = 'scoped memory for tpu_custom_call.1']
  #allocation5 [shape = 'u8[512]{0}', space=smem, size = 0x200, scoped, tag = 'prefetched SMEM operand 0']
  #allocation8 [shape = 's32[]', space=sflag, size = 0x4, offset = 0, fixed_abs, tag = 'sflag constant byte address 0x0 - dummy sync flag']
  #allocation9 [shape = 's32[]', space=sflag, size = 0x4, offset = 0, fixed_abs, tag = 'sflag constant byte address 0x0 - dummy sync flag']
  #allocation10 [shape = 'u32[]', space=smem, size = 0x4, offset = 0x44, fixed_abs, tag = 'smem constant byte address 0x44 - assertion arg 0']
  #allocation11 [shape = 'u32[]', space=smem, size = 0x4, offset = 0x48, fixed_abs, tag = 'smem constant byte address 0x48 - assertion arg 1']
  #allocation12 [shape = 's32[]', space=sflag, size = 0x4, offset = 0, fixed_abs, tag = 'sflag constant byte address 0x0 - dummy sync flag']
  #allocation13 [shape = 's32[]', space=sflag, size = 0x4, offset = 0, fixed_abs, tag = 'sflag constant byte address 0x0 - dummy sync flag']
  #allocation14 [shape = 's32[]', space=sflag, size = 0x4, offset = 0, fixed_abs, tag = 'sflag constant byte address 0x0 - dummy sync flag']
  #allocation15 [shape = 's32[]', space=sflag, size = 0x4, offset = 0, fixed_abs, tag = 'sflag constant byte address 0x0 - dummy sync flag']
  #allocation16 [shape = 's32[]', space=sflag, size = 0x4, offset = 0, fixed_abs, tag = 'sflag constant byte address 0x0 - dummy sync flag']
  #allocation17 [shape = 's32[]', space=sflag, size = 0x4, offset = 0, fixed_abs, tag = 'sflag constant byte address 0x0 - dummy sync flag']
  #allocation18 [shape = 's32[]', space=sflag, size = 0x4, offset = 0, fixed_abs, tag = 'sflag constant byte address 0x0 - dummy sync flag']
  #allocation19 [shape = 's32[]', space=sflag, size = 0x4, offset = 0, fixed_abs, tag = 'sflag constant byte address 0x0 - dummy sync flag']
  #allocation20 [shape = 's32[]', space=sflag, size = 0x4, offset = 0, fixed_abs, tag = 'sflag constant byte address 0x0 - dummy sync flag']
  #allocation21 [shape = 's32[]', space=sflag, size = 0x4, offset = 0, fixed_abs, tag = 'sflag constant byte address 0x0 - dummy sync flag']
  #allocation22 [shape = 's32[]', space=sflag, size = 0x4, offset = 0, fixed_abs, tag = 'sflag constant byte address 0x0 - dummy sync flag']
  #allocation23 [shape = 's32[]', space=sflag, size = 0x4, offset = 0, fixed_abs, tag = 'sflag constant byte address 0x0 - dummy sync flag']
  #allocation24 [shape = 's32[]', space=sflag, size = 0x4, offset = 0, fixed_abs, tag = 'sflag constant byte address 0x0 - dummy sync flag']
  #allocation25 [shape = 's32[]', space=sflag, size = 0x4, offset = 0, fixed_abs, tag = 'sflag constant byte address 0x0 - dummy sync flag']
  #allocation26 [shape = 's32[]', space=sflag, size = 0x4, offset = 0, fixed_abs, tag = 'sflag constant byte address 0x0 - dummy sync flag']
  #allocation27 [shape = 's32[]', space=sflag, size = 0x4, offset = 0, fixed_abs, tag = 'sflag constant byte address 0x0 - dummy sync flag']
  #allocation28 [shape = 's32[]', space=sflag, size = 0x4, offset = 0, fixed_abs, tag = 'sflag constant byte address 0x0 - dummy sync flag']
  #allocation29 [shape = 's32[]', space=sflag, size = 0x4, offset = 0, fixed_abs, tag = 'sflag constant byte address 0x0 - dummy sync flag']
  #allocation30 [shape = 's32[]', space=sflag, size = 0x4, offset = 0, fixed_abs, tag = 'sflag constant byte address 0x0 - dummy sync flag']
  #allocation31 [shape = 's32[]', space=sflag, size = 0x4, offset = 0, fixed_abs, tag = 'sflag constant byte address 0x0 - dummy sync flag']
  #allocation32 [shape = 's32[]', space=sflag, size = 0x4, offset = 0, fixed_abs, tag = 'sflag constant byte address 0x0 - dummy sync flag']
  #allocation33 [shape = 's32[]', space=sflag, size = 0x4, offset = 0, fixed_abs, tag = 'sflag constant byte address 0x0 - dummy sync flag']
  #allocation34 [shape = 's32[]', space=sflag, size = 0x4, offset = 0, fixed_abs, tag = 'sflag constant byte address 0x0 - dummy sync flag']
  #allocation35 [shape = 's32[]', space=sflag, size = 0x4, offset = 0, fixed_abs, tag = 'sflag constant byte address 0x0 - dummy sync flag']
  #allocation36 [shape = 's32[]', space=sflag, size = 0x4, offset = 0, fixed_abs, tag = 'sflag constant byte address 0x0 - dummy sync flag']
  #allocation37 [shape = 's32[]', space=sflag, size = 0x4, offset = 0, fixed_abs, tag = 'sflag constant byte address 0x0 - dummy sync flag']
  #allocation38 [shape = 's32[]', space=sflag, size = 0x4, offset = 0, fixed_abs, tag = 'sflag constant byte address 0x0 - dummy sync flag']
  #allocation39 [shape = 's32[]', space=sflag, size = 0x4, offset = 0, fixed_abs, tag = 'sflag constant byte address 0x0 - dummy sync flag']
  #allocation40 [shape = 's32[]', space=sflag, size = 0x4, offset = 0, fixed_abs, tag = 'sflag constant byte address 0x0 - dummy sync flag']
  #allocation41 [shape = 's32[]', space=sflag, size = 0x4, offset = 0, fixed_abs, tag = 'sflag constant byte address 0x0 - dummy sync flag']
  %s0 = inlined_call_operand.vmem [shape: s32[32], index: 0, kind: input, shape index: {}]
  %s1 = inlined_call_operand.vmem [shape: s32[32,1], index: 1, kind: input, shape index: {}]
  %s2 = inlined_call_operand.vmem [shape: s32[32,1], index: 2, kind: input, shape index: {}]
  %s3 = inlined_call_operand.hbm [shape: f32[256,128], index: 3, kind: input, shape index: {}]
  %s4 = inlined_call_operand.vmem [shape: f32[64,128], index: 4, kind: input, shape index: {}]
  %s5 = inlined_call_operand.vmem [shape: f32[2,128], index: 5, kind: input, shape index: {}]
  %s6 = inlined_call_operand.vmem [shape: f32[1,128], index: 6, kind: input, shape index: {}]
  %s7 = inlined_call_operand.vmem [shape: f32[1,128], index: 7, kind: input, shape index: {}]
  %s8 = inlined_call_operand.hbm [shape: f32[32,128], index: 8, kind: output, shape index: {}]
  %s9 = sld [smem:[#allocation0]]
  $region129: #{tpu_custom_call.1} parent=0
    _
  %s11 = ssub.s32 1, %s9
  %s12 = scalar_select 0, %s11, %s9
  %s13 = sshll.u32 %s0, 4
  %s14 = int_to_ptr.vmem [resolvable:$true] %s13
  %16 = dma.vmem_to_smem %s14, 16, [#allocation5], [#allocation4]
  %17 = dma.done [#allocation4], 16
  %18 = sfence
  $region1: #{tpu_custom_call.1} parent=0
    #allocation6 [shape = 'u8[8192]{0}', space=vmem, size = 0x2000, scoped, tag = 'output window, operand 0']
    #allocation7 [shape = 's32[2]{0}', space=sflag, size = 0x8, scoped, tag = 'scoped memory for tpu_custom_call.1']
    %19 = vsyncpa [#allocation7], 0
    %s20 = scalar_lea.sflag [#allocation7], 1
    %21 = vsyncpa %s20, 0
    loop: start=0, step=1, limit=6
    $region2: #{tpu_custom_call.1} parent=1 // loop_pre_header
      _
    $region3: #{tpu_custom_call.1} parent=1 // loop_header
      %s23 = sphi 0, %s27
      %p24 = scmp.ge.s32.totalorder %s23, 6
      %s30 = sphi 0, %s42
      %s31 = sphi 0, %s38
      %s32 = sphi 0, %s30
      %s33 = sphi 0, %s31
      %s34 = sphi 0, %s32
      %s35 = sphi 0, %s33
      %s49 = sphi 0, %s51
      %s52 = sphi 0, %s49
      %s53 = sphi 0, %s52
      %s69 = sphi 0, %s53
      %s79 = sphi 0, %s81
      %s82 = sphi 0, %s79
      %s83 = sphi 0, %s82
      %s99 = sphi 0, %s83
      %s103 = sphi 0, %s103
      %s105 = sphi 0, %s103
      %s106 = sphi 0, %s105
      %s120 = sphi 0, %s106
      %s124 = sphi 0, %s124
      %s126 = sphi 0, %s124
      %s127 = sphi 0, %s126
      %s141 = sphi 0, %s127
      %s145 = sphi 0, %s145
      %s147 = sphi 0, %s145
      %s148 = sphi 0, %s147
      %s162 = sphi 0, %s148
      %s166 = sphi 0, %s166
      %s168 = sphi 0, %s166
      %s169 = sphi 0, %s168
      %s183 = sphi 0, %s169
      %s193 = sphi 0, %s195
      %s196 = sphi 0, %s193
      %s197 = sphi 0, %s196
      %s213 = sphi 0, %s197
    $region4: #{tpu_custom_call.1} parent=1 // loop_header_branch
      %26 = sbr.rel (%p24) target = $region8
    $region5: #{tpu_custom_call.1} parent=1 // loop_body
      %s28 = ssub.s32 %s23, 1
      %s29 = ssub.s32 %s23, 2
      %s36 = sadd.s32 1, %s31
      %p37 = scmp.ge.s32.totalorder %s36, 2
      %s38 = scalar_select %p37, 0, %s36
      %s39 = sadd.s32 1, %s30
      %s40 = scalar_select %p37, %s39, %s30
      %p41 = scmp.ge.s32.totalorder %s40, 2
      %s42 = scalar_select %p41, 0, %s40
      %s43 = smul.u32 %s30, 2
      %s44 = sadd.s32 %s43, %s31
      %s45 = smul.u32 %s42, 2
      %s46 = sadd.s32 %s45, %s38
      %s47 = ssub.s32 %s44, %s46
      %p48 = scmp.eq.s32.totalorder %s47, 0
      %s50 = sadd.s32 %s49, 1
      %s51 = scalar_select %p48, %s49, %s50
      %p54 = pneg %p48
      %p55 = scmp.eq.s32.totalorder %s23, 3
      %p56 = por %p54, %p55
      %p57 = scmp.ne.s32.totalorder %s49, %s52
      %p58 = scmp.eq.s32.totalorder %s23, 0
      %p59 = por %p57, %p58
      %p60 = scmp.ne.s32.totalorder %s49, %s52
      %p61 = scmp.eq.s32.totalorder %s28, 3
      %p62 = por %p60, %p61
      %p63 = scmp.ne.s32.totalorder %s52, %s53
      %p64 = scmp.eq.s32.totalorder %s28, 0
      %p65 = por %p63, %p64
      %p66 = scmp.ne.s32.totalorder %s52, %s53
      %p67 = scmp.eq.s32.totalorder %s29, 3
      %p68 = por %p66, %p67
      %p70 = scmp.ne.s32.totalorder %s53, %s69
      %p71 = scmp.eq.s32.totalorder %s29, 0
      %p72 = por %p70, %p71
      %s73 = smul.u32 %s30, 2
      %s74 = sadd.s32 %s73, %s31
      %s75 = smul.u32 %s42, 2
      %s76 = sadd.s32 %s75, %s38
      %s77 = ssub.s32 %s74, %s76
      %p78 = scmp.eq.s32.totalorder %s77, 0
      %s80 = sadd.s32 %s79, 1
      %s81 = scalar_select %p78, %s79, %s80
      %p84 = pneg %p78
      %p85 = scmp.eq.s32.totalorder %s23, 3
      %p86 = por %p84, %p85
      %p87 = scmp.ne.s32.totalorder %s79, %s82
      %p88 = scmp.eq.s32.totalorder %s23, 0
      %p89 = por %p87, %p88
      %p90 = scmp.ne.s32.totalorder %s79, %s82
      %p91 = scmp.eq.s32.totalorder %s28, 3
      %p92 = por %p90, %p91
      %p93 = scmp.ne.s32.totalorder %s82, %s83
      %p94 = scmp.eq.s32.totalorder %s28, 0
      %p95 = por %p93, %p94
      %p96 = scmp.ne.s32.totalorder %s82, %s83
      %p97 = scmp.eq.s32.totalorder %s29, 3
      %p98 = por %p96, %p97
      %p100 = scmp.ne.s32.totalorder %s83, %s99
      %p101 = scmp.eq.s32.totalorder %s29, 0
      %p102 = por %p100, %p101
      %s104 = sadd.s32 %s103, 1
      %p107 = scmp.eq.s32.totalorder %s23, 3
      %p108 = scmp.ne.s32.totalorder %s103, %s105
      %p109 = scmp.eq.s32.totalorder %s23, 0
      %p110 = por %p108, %p109
      %p111 = scmp.ne.s32.totalorder %s103, %s105
      %p112 = scmp.eq.s32.totalorder %s28, 3
      %p113 = por %p111, %p112
      %p114 = scmp.ne.s32.totalorder %s105, %s106
      %p115 = scmp.eq.s32.totalorder %s28, 0
      %p116 = por %p114, %p115
      %p117 = scmp.ne.s32.totalorder %s105, %s106
      %p118 = scmp.eq.s32.totalorder %s29, 3
      %p119 = por %p117, %p118
      %p121 = scmp.ne.s32.totalorder %s106, %s120
      %p122 = scmp.eq.s32.totalorder %s29, 0
      %p123 = por %p121, %p122
      %s125 = sadd.s32 %s124, 1
      %p128 = scmp.eq.s32.totalorder %s23, 3
      %p129 = scmp.ne.s32.totalorder %s124, %s126
      %p130 = scmp.eq.s32.totalorder %s23, 0
      %p131 = por %p129, %p130
      %p132 = scmp.ne.s32.totalorder %s124, %s126
      %p133 = scmp.eq.s32.totalorder %s28, 3
      %p134 = por %p132, %p133
      %p135 = scmp.ne.s32.totalorder %s126, %s127
      %p136 = scmp.eq.s32.totalorder %s28, 0
      %p137 = por %p135, %p136
      %p138 = scmp.ne.s32.totalorder %s126, %s127
      %p139 = scmp.eq.s32.totalorder %s29, 3
      %p140 = por %p138, %p139
      %p142 = scmp.ne.s32.totalorder %s127, %s141
      %p143 = scmp.eq.s32.totalorder %s29, 0
      %p144 = por %p142, %p143
      %s146 = sadd.s32 %s145, 1
      %p149 = scmp.eq.s32.totalorder %s23, 3
      %p150 = scmp.ne.s32.totalorder %s145, %s147
      %p151 = scmp.eq.s32.totalorder %s23, 0
      %p152 = por %p150, %p151
      %p153 = scmp.ne.s32.totalorder %s145, %s147
      %p154 = scmp.eq.s32.totalorder %s28, 3
      %p155 = por %p153, %p154
      %p156 = scmp.ne.s32.totalorder %s147, %s148
      %p157 = scmp.eq.s32.totalorder %s28, 0
      %p158 = por %p156, %p157
      %p159 = scmp.ne.s32.totalorder %s147, %s148
      %p160 = scmp.eq.s32.totalorder %s29, 3
      %p161 = por %p159, %p160
      %p163 = scmp.ne.s32.totalorder %s148, %s162
      %p164 = scmp.eq.s32.totalorder %s29, 0
      %p165 = por %p163, %p164
      %s167 = sadd.s32 %s166, 1
      %p170 = scmp.eq.s32.totalorder %s23, 3
      %p171 = scmp.ne.s32.totalorder %s166, %s168
      %p172 = scmp.eq.s32.totalorder %s23, 0
      %p173 = por %p171, %p172
      %p174 = scmp.ne.s32.totalorder %s166, %s168
      %p175 = scmp.eq.s32.totalorder %s28, 3
      %p176 = por %p174, %p175
      %p177 = scmp.ne.s32.totalorder %s168, %s169
      %p178 = scmp.eq.s32.totalorder %s28, 0
      %p179 = por %p177, %p178
      %p180 = scmp.ne.s32.totalorder %s168, %s169
      %p181 = scmp.eq.s32.totalorder %s29, 3
      %p182 = por %p180, %p181
      %p184 = scmp.ne.s32.totalorder %s169, %s183
      %p185 = scmp.eq.s32.totalorder %s29, 0
      %p186 = por %p184, %p185
      %s187 = smul.u32 %s30, 2
      %s188 = sadd.s32 %s187, %s31
      %s189 = smul.u32 %s42, 2
      %s190 = sadd.s32 %s189, %s38
      %s191 = ssub.s32 %s188, %s190
      %p192 = scmp.eq.s32.totalorder %s191, 0
      %s194 = sadd.s32 %s193, 1
      %s195 = scalar_select %p192, %s193, %s194
      %p198 = pneg %p192
      %p199 = scmp.eq.s32.totalorder %s23, 3
      %p200 = por %p198, %p199
      %p201 = scmp.ne.s32.totalorder %s193, %s196
      %p202 = scmp.eq.s32.totalorder %s23, 0
      %p203 = por %p201, %p202
      %p204 = scmp.ne.s32.totalorder %s193, %s196
      %p205 = scmp.eq.s32.totalorder %s28, 3
      %p206 = por %p204, %p205
      %p207 = scmp.ne.s32.totalorder %s196, %s197
      %p208 = scmp.eq.s32.totalorder %s28, 0
      %p209 = por %p207, %p208
      %p210 = scmp.ne.s32.totalorder %s196, %s197
      %p211 = scmp.eq.s32.totalorder %s29, 3
      %p212 = por %p210, %p211
      %p214 = scmp.ne.s32.totalorder %s197, %s213
      %p215 = scmp.eq.s32.totalorder %s29, 0
      %p216 = por %p214, %p215
      %p217 = scmp.le.s32.totalorder 1, %s23
      %p218 = scmp.lt.s32.totalorder %s23, 5
      %p219 = pnand %p217, %p218
      %p220 = pneg %p219
      // Predicated region
      $region9: #{tpu_custom_call.1} parent=5 // pred_check
        _
      $region10: #{tpu_custom_call.1} parent=5 // pred_check_branch
        %222 = sbr.rel (%p219) target = $region12
      $region11: #{tpu_custom_call.1} parent=5 // pred_region
        %s223 = ssub.s32 %s23, 1
        // Predicated region
        $region13: #{tpu_custom_call.1} parent=11 // pred_check
          %p224 = pneg %p116
        $region14: #{tpu_custom_call.1} parent=11 // pred_check_branch
          %226 = sbr.rel (%p224) target = $region16
        $region15: #{tpu_custom_call.1} parent=11 // pred_region
          _
        $region16: #{tpu_custom_call.1} parent=11 // pred_fallthru
          _
        // Predicated region
        $region17: #{tpu_custom_call.1} parent=11 // pred_check
          %p227 = pneg %p137
        $region18: #{tpu_custom_call.1} parent=11 // pred_check_branch
          %229 = sbr.rel (%p227) target = $region20
        $region19: #{tpu_custom_call.1} parent=11 // pred_region
          _
        $region20: #{tpu_custom_call.1} parent=11 // pred_fallthru
          _
        // Predicated region
        $region21: #{tpu_custom_call.1} parent=11 // pred_check
          %p230 = pneg %p158
        $region22: #{tpu_custom_call.1} parent=11 // pred_check_branch
          %232 = sbr.rel (%p230) target = $region24
        $region23: #{tpu_custom_call.1} parent=11 // pred_region
          _
        $region24: #{tpu_custom_call.1} parent=11 // pred_fallthru
          _
        // Predicated region
        $region25: #{tpu_custom_call.1} parent=11 // pred_check
          %p233 = pneg %p179
        $region26: #{tpu_custom_call.1} parent=11 // pred_check_branch
          %235 = sbr.rel (%p233) target = $region28
        $region27: #{tpu_custom_call.1} parent=11 // pred_region
          _
        $region28: #{tpu_custom_call.1} parent=11 // pred_fallthru
          _
      $region12: #{tpu_custom_call.1} parent=5 // pred_fallthru
        _
      %p236 = scmp.lt.s32.totalorder %s23, 4
      // Predicated region
      $region29: #{tpu_custom_call.1} parent=5 // pred_check
        %p237 = pneg %p236
      $region30: #{tpu_custom_call.1} parent=5 // pred_check_branch
        %239 = sbr.rel (%p237) target = $region32
      $region31: #{tpu_custom_call.1} parent=5 // pred_region
        // Predicated region
        $region33: #{tpu_custom_call.1} parent=31 // pred_check
          %p240 = pneg %p59
        $region34: #{tpu_custom_call.1} parent=31 // pred_check_branch
          %242 = sbr.rel (%p240) target = $region36
        $region35: #{tpu_custom_call.1} parent=31 // pred_region
          %s243 = smul.u32 %s30, 2
          %s244 = sadd.s32 %s243, %s31
          %p245 = scmp.lt.s32.totalorder %s244, 3
          %s246 = scalar_select %p245, %s244, 3
          %s247 = smul.addr %s246, 8
          %s248 = scalar_lea.vmem %s1, %s247
          %s249 = smul.u32 %s30, 2
          %s250 = sadd.s32 %s249, %s31
        $region36: #{tpu_custom_call.1} parent=31 // pred_fallthru
          _
        // Predicated region
        $region37: #{tpu_custom_call.1} parent=31 // pred_check
          %p251 = pneg %p89
        $region38: #{tpu_custom_call.1} parent=31 // pred_check_branch
          %253 = sbr.rel (%p251) target = $region40
        $region39: #{tpu_custom_call.1} parent=31 // pred_region
          %s254 = smul.u32 %s30, 2
          %s255 = sadd.s32 %s254, %s31
          %p256 = scmp.lt.s32.totalorder %s255, 3
          %s257 = scalar_select %p256, %s255, 3
          %s258 = smul.addr %s257, 8
          %s259 = scalar_lea.vmem %s2, %s258
          %s260 = smul.u32 %s30, 2
          %s261 = sadd.s32 %s260, %s31
        $region40: #{tpu_custom_call.1} parent=31 // pred_fallthru
          _
      $region32: #{tpu_custom_call.1} parent=5 // pred_fallthru
        _
      %p262 = scmp.le.s32.totalorder 1, %s23
      %p263 = scmp.lt.s32.totalorder %s23, 5
      %p264 = pnand %p262, %p263
      %p265 = pneg %p264
      // Predicated region
      $region41: #{tpu_custom_call.1} parent=5 // pred_check
        _
      $region42: #{tpu_custom_call.1} parent=5 // pred_check_branch
        %267 = sbr.rel (%p264) target = $region44
      $region43: #{tpu_custom_call.1} parent=5 // pred_region
        %s268 = ssub.s32 %s23, 1
        %s269 = smul.u32 %s32, 2
        %s270 = sadd.s32 %s269, %s33
        %p271 = scmp.lt.s32.totalorder %s270, 3
        %s272 = scalar_select %p271, %s270, 3
        %s273 = smul.addr %s272, 8
        %s274 = scalar_lea.vmem %s1, %s273
        %p275 = pneg %p65
        %p276 = pneg %p62
        %s277 = smul.u32 %s32, 2
        %s278 = sadd.s32 %s277, %s33
        %p279 = scmp.lt.s32.totalorder %s278, 3
        %s280 = scalar_select %p279, %s278, 3
        %s281 = smul.addr %s280, 8
        %s282 = scalar_lea.vmem %s2, %s281
        %p283 = pneg %p95
        %p284 = pneg %p92
        %p285 = pneg %p116
        %p286 = pneg %p113
        %p287 = pneg %p137
        %p288 = pneg %p134
        %p289 = pneg %p158
        %p290 = pneg %p155
        %p291 = pneg %p179
        %p292 = pneg %p176
        %p293 = pneg %p209
        %p294 = pneg %p206
        %s295 = sand.u32 %s196, 1
        %s296 = scalar_lea.sflag [#allocation7], %s295
        %s297 = sand.u32 %s196, 1
        %s298 = smul.addr %s297, 8
        %s299 = scalar_lea.vmem [#allocation6], %s298
        %s300 = smul.u32 %s32, 2
        %s301 = sadd.s32 %s300, %s33
        %p302 = scmp.lt.s32.totalorder %s301, 3
        %s303 = scalar_select %p302, %s301, 3
        %s304 = smul.addr %s303, 8
        %s305 = scalar_lea.vmem %s1, %s304
        %s306 = smul.u32 %s32, 2
        %s307 = sadd.s32 %s306, %s33
        %s308 = smul.u32 %s32, 2
        %s309 = sadd.s32 %s308, %s33
        %p310 = scmp.lt.s32.totalorder %s309, 3
        %s311 = scalar_select %p310, %s309, 3
        %s312 = smul.addr %s311, 8
        %s313 = scalar_lea.vmem %s2, %s312
        %s314 = smul.u32 %s32, 2
        %s315 = sadd.s32 %s314, %s33
        %s316 = smul.u32 %s32, 2
        %s317 = sadd.s32 %s316, %s33
        %s318 = smul.u32 %s32, 2
        %s319 = sadd.s32 %s318, %s33
        %p320 = scmp.eq.s32.totalorder %s33, 0
        // Predicated region
        $region45: #{tpu_custom_call.1} parent=43 // pred_check
          %p321 = pneg %p320
        $region46: #{tpu_custom_call.1} parent=43 // pred_check_branch
          %323 = sbr.rel (%p321) target = $region48
        $region47: #{tpu_custom_call.1} parent=43 // pred_region
          %s324 = smul.u32 %s319, 8
          %s325 = sld [smem:[#allocation5 + %s324]]
          %s326 = smul.addr %s325, 16
          %s327 = scalar_lea.hbm %s3, %s326
          // Predicated region
          $region49: #{tpu_custom_call.1} parent=47 // pred_check
            _
          $region50: #{tpu_custom_call.1} parent=47 // pred_check_branch
            %329 = sbr.rel target = $region52
          $region51: #{tpu_custom_call.1} parent=47 // pred_region
            %330 = sst [smem:[#allocation10]] [#allocation9]
            %331 = sst [smem:[#allocation11]] [#allocation8]
          $region52: #{tpu_custom_call.1} parent=47 // pred_fallthru
            _
          %333 = shalt.err (0)
          %s335 = sshll.u32 [#allocation2], 4
          %s336 = int_to_ptr.vmem [resolvable:$true] %s335
          %338 = dma.hbm_to_vmem [thread:$0]  %s327, 16, %s336, [#allocation3]
          %s339 = sadd.s32 %s324, 1
          %s340 = sld [smem:[#allocation5 + %s339]]
          %s341 = smul.addr %s340, 16
          %s342 = scalar_lea.hbm %s3, %s341
          %s343 = scalar_lea.vmem [#allocation2], 1
          // Predicated region
          $region53: #{tpu_custom_call.1} parent=47 // pred_check
            _
          $region54: #{tpu_custom_call.1} parent=47 // pred_check_branch
            %345 = sbr.rel target = $region56
          $region55: #{tpu_custom_call.1} parent=47 // pred_region
            %346 = sst [smem:[#allocation10]] [#allocation13]
            %347 = sst [smem:[#allocation11]] [#allocation12]
          $region56: #{tpu_custom_call.1} parent=47 // pred_fallthru
            _
          %349 = shalt.err (0)
          %s351 = sshll.u32 %s343, 4
          %s352 = int_to_ptr.vmem [resolvable:$true] %s351
          %354 = dma.hbm_to_vmem [thread:$0]  %s342, 16, %s352, [#allocation3]
          %s355 = sadd.s32 %s324, 2
          %s356 = sld [smem:[#allocation5 + %s355]]
          %s357 = smul.addr %s356, 16
          %s358 = scalar_lea.hbm %s3, %s357
          %s359 = scalar_lea.vmem [#allocation2], 2
          // Predicated region
          $region57: #{tpu_custom_call.1} parent=47 // pred_check
            _
          $region58: #{tpu_custom_call.1} parent=47 // pred_check_branch
            %361 = sbr.rel target = $region60
          $region59: #{tpu_custom_call.1} parent=47 // pred_region
            %362 = sst [smem:[#allocation10]] [#allocation15]
            %363 = sst [smem:[#allocation11]] [#allocation14]
          $region60: #{tpu_custom_call.1} parent=47 // pred_fallthru
            _
          %365 = shalt.err (0)
          %s367 = sshll.u32 %s359, 4
          %s368 = int_to_ptr.vmem [resolvable:$true] %s367
          %370 = dma.hbm_to_vmem [thread:$0]  %s358, 16, %s368, [#allocation3]
          %s371 = sadd.s32 %s324, 3
          %s372 = sld [smem:[#allocation5 + %s371]]
          %s373 = smul.addr %s372, 16
          %s374 = scalar_lea.hbm %s3, %s373
          %s375 = scalar_lea.vmem [#allocation2], 3
          // Predicated region
          $region61: #{tpu_custom_call.1} parent=47 // pred_check
            _
          $region62: #{tpu_custom_call.1} parent=47 // pred_check_branch
            %377 = sbr.rel target = $region64
          $region63: #{tpu_custom_call.1} parent=47 // pred_region
            %378 = sst [smem:[#allocation10]] [#allocation17]
            %379 = sst [smem:[#allocation11]] [#allocation16]
          $region64: #{tpu_custom_call.1} parent=47 // pred_fallthru
            _
          %381 = shalt.err (0)
          %s383 = sshll.u32 %s375, 4
          %s384 = int_to_ptr.vmem [resolvable:$true] %s383
          %386 = dma.hbm_to_vmem [thread:$0]  %s374, 16, %s384, [#allocation3]
          %s387 = sadd.s32 %s324, 4
          %s388 = sld [smem:[#allocation5 + %s387]]
          %s389 = smul.addr %s388, 16
          %s390 = scalar_lea.hbm %s3, %s389
          %s391 = scalar_lea.vmem [#allocation2], 4
          // Predicated region
          $region65: #{tpu_custom_call.1} parent=47 // pred_check
            _
          $region66: #{tpu_custom_call.1} parent=47 // pred_check_branch
            %393 = sbr.rel target = $region68
          $region67: #{tpu_custom_call.1} parent=47 // pred_region
            %394 = sst [smem:[#allocation10]] [#allocation19]
            %395 = sst [smem:[#allocation11]] [#allocation18]
          $region68: #{tpu_custom_call.1} parent=47 // pred_fallthru
            _
          %397 = shalt.err (0)
          %s399 = sshll.u32 %s391, 4
          %s400 = int_to_ptr.vmem [resolvable:$true] %s399
          %402 = dma.hbm_to_vmem [thread:$0]  %s390, 16, %s400, [#allocation3]
          %s403 = sadd.s32 %s324, 5
          %s404 = sld [smem:[#allocation5 + %s403]]
          %s405 = smul.addr %s404, 16
          %s406 = scalar_lea.hbm %s3, %s405
          %s407 = scalar_lea.vmem [#allocation2], 5
          // Predicated region
          $region69: #{tpu_custom_call.1} parent=47 // pred_check
            _
          $region70: #{tpu_custom_call.1} parent=47 // pred_check_branch
            %409 = sbr.rel target = $region72
          $region71: #{tpu_custom_call.1} parent=47 // pred_region
            %410 = sst [smem:[#allocation10]] [#allocation21]
            %411 = sst [smem:[#allocation11]] [#allocation20]
          $region72: #{tpu_custom_call.1} parent=47 // pred_fallthru
            _
          %413 = shalt.err (0)
          %s415 = sshll.u32 %s407, 4
          %s416 = int_to_ptr.vmem [resolvable:$true] %s415
          %418 = dma.hbm_to_vmem [thread:$0]  %s406, 16, %s416, [#allocation3]
          %s419 = sadd.s32 %s324, 6
          %s420 = sld [smem:[#allocation5 + %s419]]
          %s421 = smul.addr %s420, 16
          %s422 = scalar_lea.hbm %s3, %s421
          %s423 = scalar_lea.vmem [#allocation2], 6
          // Predicated region
          $region73: #{tpu_custom_call.1} parent=47 // pred_check
            _
          $region74: #{tpu_custom_call.1} parent=47 // pred_check_branch
            %425 = sbr.rel target = $region76
          $region75: #{tpu_custom_call.1} parent=47 // pred_region
            %426 = sst [smem:[#allocation10]] [#allocation23]
            %427 = sst [smem:[#allocation11]] [#allocation22]
          $region76: #{tpu_custom_call.1} parent=47 // pred_fallthru
            _
          %429 = shalt.err (0)
          %s431 = sshll.u32 %s423, 4
          %s432 = int_to_ptr.vmem [resolvable:$true] %s431
          %434 = dma.hbm_to_vmem [thread:$0]  %s422, 16, %s432, [#allocation3]
          %s435 = sadd.s32 %s324, 7
          %s436 = sld [smem:[#allocation5 + %s435]]
          %s437 = smul.addr %s436, 16
          %s438 = scalar_lea.hbm %s3, %s437
          %s439 = scalar_lea.vmem [#allocation2], 7
          // Predicated region
          $region77: #{tpu_custom_call.1} parent=47 // pred_check
            _
          $region78: #{tpu_custom_call.1} parent=47 // pred_check_branch
            %441 = sbr.rel target = $region80
          $region79: #{tpu_custom_call.1} parent=47 // pred_region
            %442 = sst [smem:[#allocation10]] [#allocation25]
            %443 = sst [smem:[#allocation11]] [#allocation24]
          $region80: #{tpu_custom_call.1} parent=47 // pred_fallthru
            _
          %445 = shalt.err (0)
          %s447 = sshll.u32 %s439, 4
          %s448 = int_to_ptr.vmem [resolvable:$true] %s447
          %450 = dma.hbm_to_vmem [thread:$0]  %s438, 16, %s448, [#allocation3]
        $region48: #{tpu_custom_call.1} parent=43 // pred_fallthru
          _
        %s451 = sadd.s32 %s33, 1
        %p452 = scmp.lt.s32.totalorder %s451, 2
        // Predicated region
        $region81: #{tpu_custom_call.1} parent=43 // pred_check
          %p453 = pneg %p452
        $region82: #{tpu_custom_call.1} parent=43 // pred_check_branch
          %455 = sbr.rel (%p453) target = $region84
        $region83: #{tpu_custom_call.1} parent=43 // pred_region
          %s456 = sadd.s32 %s319, 1
          %p457 = scmp.lt.s32.totalorder %s451, 0
          %s458 = ssub.s32 0, %s451
          %s459 = scalar_select %p457, %s458, %s451
          %s460 = sand.u32 %s459, 1
          %s461 = ssub.s32 0, %s460
          %s462 = scalar_select %p457, %s461, %s460
          %p463 = scmp.ne.s32.totalorder %s462, 0
          %p464 = scmp.lt.s32.totalorder %s462, 0
          %p465 = pnand %p464, %p463
          %p466 = pneg %p465
          %s467 = sadd.s32 %s462, 2
          %s468 = scalar_select %p466, %s467, %s462
          %s469 = smul.u32 %s456, 8
          %s470 = smul.u32 %s468, 8
          %s471 = sld [smem:[#allocation5 + %s469]]
          %s472 = smul.addr %s471, 16
          %s473 = scalar_lea.hbm %s3, %s472
          %s474 = scalar_lea.vmem [#allocation2], %s470
          %s475 = scalar_lea.sflag [#allocation3], %s468
          // Predicated region
          $region85: #{tpu_custom_call.1} parent=83 // pred_check
            _
          $region86: #{tpu_custom_call.1} parent=83 // pred_check_branch
            %477 = sbr.rel target = $region88
          $region87: #{tpu_custom_call.1} parent=83 // pred_region
            %478 = sst [smem:[#allocation10]] [#allocation27]
            %479 = sst [smem:[#allocation11]] [#allocation26]
          $region88: #{tpu_custom_call.1} parent=83 // pred_fallthru
            _
          %481 = shalt.err (0)
          %s483 = sshll.u32 %s474, 4
          %s484 = int_to_ptr.vmem [resolvable:$true] %s483
          %486 = dma.hbm_to_vmem [thread:$0]  %s473, 16, %s484, %s475
          %s487 = sadd.s32 %s469, 1
          %s488 = sld [smem:[#allocation5 + %s487]]
          %s489 = sadd.s32 %s470, 1
          %s490 = smul.addr %s488, 16
          %s491 = scalar_lea.hbm %s3, %s490
          %s492 = scalar_lea.vmem [#allocation2], %s489
          // Predicated region
          $region89: #{tpu_custom_call.1} parent=83 // pred_check
            _
          $region90: #{tpu_custom_call.1} parent=83 // pred_check_branch
            %494 = sbr.rel target = $region92
          $region91: #{tpu_custom_call.1} parent=83 // pred_region
            %495 = sst [smem:[#allocation10]] [#allocation29]
            %496 = sst [smem:[#allocation11]] [#allocation28]
          $region92: #{tpu_custom_call.1} parent=83 // pred_fallthru
            _
          %498 = shalt.err (0)
          %s500 = sshll.u32 %s492, 4
          %s501 = int_to_ptr.vmem [resolvable:$true] %s500
          %503 = dma.hbm_to_vmem [thread:$0]  %s491, 16, %s501, %s475
          %s504 = sadd.s32 %s469, 2
          %s505 = sld [smem:[#allocation5 + %s504]]
          %s506 = sadd.s32 %s470, 2
          %s507 = smul.addr %s505, 16
          %s508 = scalar_lea.hbm %s3, %s507
          %s509 = scalar_lea.vmem [#allocation2], %s506
          // Predicated region
          $region93: #{tpu_custom_call.1} parent=83 // pred_check
            _
          $region94: #{tpu_custom_call.1} parent=83 // pred_check_branch
            %511 = sbr.rel target = $region96
          $region95: #{tpu_custom_call.1} parent=83 // pred_region
            %512 = sst [smem:[#allocation10]] [#allocation31]
            %513 = sst [smem:[#allocation11]] [#allocation30]
          $region96: #{tpu_custom_call.1} parent=83 // pred_fallthru
            _
          %515 = shalt.err (0)
          %s517 = sshll.u32 %s509, 4
          %s518 = int_to_ptr.vmem [resolvable:$true] %s517
          %520 = dma.hbm_to_vmem [thread:$0]  %s508, 16, %s518, %s475
          %s521 = sadd.s32 %s469, 3
          %s522 = sld [smem:[#allocation5 + %s521]]
          %s523 = sadd.s32 %s470, 3
          %s524 = smul.addr %s522, 16
          %s525 = scalar_lea.hbm %s3, %s524
          %s526 = scalar_lea.vmem [#allocation2], %s523
          // Predicated region
          $region97: #{tpu_custom_call.1} parent=83 // pred_check
            _
          $region98: #{tpu_custom_call.1} parent=83 // pred_check_branch
            %528 = sbr.rel target = $region100
          $region99: #{tpu_custom_call.1} parent=83 // pred_region
            %529 = sst [smem:[#allocation10]] [#allocation33]
            %530 = sst [smem:[#allocation11]] [#allocation32]
          $region100: #{tpu_custom_call.1} parent=83 // pred_fallthru
            _
          %532 = shalt.err (0)
          %s534 = sshll.u32 %s526, 4
          %s535 = int_to_ptr.vmem [resolvable:$true] %s534
          %537 = dma.hbm_to_vmem [thread:$0]  %s525, 16, %s535, %s475
          %s538 = sadd.s32 %s469, 4
          %s539 = sld [smem:[#allocation5 + %s538]]
          %s540 = sadd.s32 %s470, 4
          %s541 = smul.addr %s539, 16
          %s542 = scalar_lea.hbm %s3, %s541
          %s543 = scalar_lea.vmem [#allocation2], %s540
          // Predicated region
          $region101: #{tpu_custom_call.1} parent=83 // pred_check
            _
          $region102: #{tpu_custom_call.1} parent=83 // pred_check_branch
            %545 = sbr.rel target = $region104
          $region103: #{tpu_custom_call.1} parent=83 // pred_region
            %546 = sst [smem:[#allocation10]] [#allocation35]
            %547 = sst [smem:[#allocation11]] [#allocation34]
          $region104: #{tpu_custom_call.1} parent=83 // pred_fallthru
            _
          %549 = shalt.err (0)
          %s551 = sshll.u32 %s543, 4
          %s552 = int_to_ptr.vmem [resolvable:$true] %s551
          %554 = dma.hbm_to_vmem [thread:$0]  %s542, 16, %s552, %s475
          %s555 = sadd.s32 %s469, 5
          %s556 = sld [smem:[#allocation5 + %s555]]
          %s557 = sadd.s32 %s470, 5
          %s558 = smul.addr %s556, 16
          %s559 = scalar_lea.hbm %s3, %s558
          %s560 = scalar_lea.vmem [#allocation2], %s557
          // Predicated region
          $region105: #{tpu_custom_call.1} parent=83 // pred_check
            _
          $region106: #{tpu_custom_call.1} parent=83 // pred_check_branch
            %562 = sbr.rel target = $region108
          $region107: #{tpu_custom_call.1} parent=83 // pred_region
            %563 = sst [smem:[#allocation10]] [#allocation37]
            %564 = sst [smem:[#allocation11]] [#allocation36]
          $region108: #{tpu_custom_call.1} parent=83 // pred_fallthru
            _
          %566 = shalt.err (0)
          %s568 = sshll.u32 %s560, 4
          %s569 = int_to_ptr.vmem [resolvable:$true] %s568
          %571 = dma.hbm_to_vmem [thread:$0]  %s559, 16, %s569, %s475
          %s572 = sadd.s32 %s469, 6
          %s573 = sld [smem:[#allocation5 + %s572]]
          %s574 = sadd.s32 %s470, 6
          %s575 = smul.addr %s573, 16
          %s576 = scalar_lea.hbm %s3, %s575
          %s577 = scalar_lea.vmem [#allocation2], %s574
          // Predicated region
          $region109: #{tpu_custom_call.1} parent=83 // pred_check
            _
          $region110: #{tpu_custom_call.1} parent=83 // pred_check_branch
            %579 = sbr.rel target = $region112
          $region111: #{tpu_custom_call.1} parent=83 // pred_region
            %580 = sst [smem:[#allocation10]] [#allocation39]
            %581 = sst [smem:[#allocation11]] [#allocation38]
          $region112: #{tpu_custom_call.1} parent=83 // pred_fallthru
            _
          %583 = shalt.err (0)
          %s585 = sshll.u32 %s577, 4
          %s586 = int_to_ptr.vmem [resolvable:$true] %s585
          %588 = dma.hbm_to_vmem [thread:$0]  %s576, 16, %s586, %s475
          %s589 = sadd.s32 %s469, 7
          %s590 = sld [smem:[#allocation5 + %s589]]
          %s591 = sadd.s32 %s470, 7
          %s592 = smul.addr %s590, 16
          %s593 = scalar_lea.hbm %s3, %s592
          %s594 = scalar_lea.vmem [#allocation2], %s591
          // Predicated region
          $region113: #{tpu_custom_call.1} parent=83 // pred_check
            _
          $region114: #{tpu_custom_call.1} parent=83 // pred_check_branch
            %596 = sbr.rel target = $region116
          $region115: #{tpu_custom_call.1} parent=83 // pred_region
            %597 = sst [smem:[#allocation10]] [#allocation41]
            %598 = sst [smem:[#allocation11]] [#allocation40]
          $region116: #{tpu_custom_call.1} parent=83 // pred_fallthru
            _
          %600 = shalt.err (0)
          %s602 = sshll.u32 %s594, 4
          %s603 = int_to_ptr.vmem [resolvable:$true] %s602
          %605 = dma.hbm_to_vmem [thread:$0]  %s593, 16, %s603, %s475
        $region84: #{tpu_custom_call.1} parent=43 // pred_fallthru
          _
        %p606 = scmp.lt.s32.totalorder %s33, 0
        %s607 = ssub.s32 0, %s33
        %s608 = scalar_select %p606, %s607, %s33
        %s609 = sand.u32 %s608, 1
        %s610 = ssub.s32 0, %s609
        %s611 = scalar_select %p606, %s610, %s609
        %p612 = scmp.ne.s32.totalorder %s611, 0
        %p613 = scmp.lt.s32.totalorder %s611, 0
        %p614 = pnand %p613, %p612
        %p615 = pneg %p614
        %s616 = sadd.s32 %s611, 2
        %s617 = scalar_select %p615, %s616, %s611
        %s618 = smul.u32 %s617, 8
        %s619 = scalar_lea.vmem [#allocation2], %s618
        %s620 = scalar_lea.sflag [#allocation3], %s617
        %s621 = smul.u32 8, 1
        %s622 = sshll.u32 %s621, 4
        %623 = dma.done %s620, %s622
        %v624 = vld [vmem:[%s619] sm:$0xff]
        %v625 = vld [vmem:[%s305] sm:$0xff]
        %v626 = vlaneseq
        %v627 = vand.u32 %v626, 127
        %628 = vset.pattern.permute.xlu0 0
        %629 = vperm.xlu0 %628, %v625
        %v630 = vpop.permute.xlu0 %629
        %vm631 = vcmp.eq.s32.totalorder %v627, %v630
        %v632 = vsel %vm631, 1, 0
        %v633 = vcvt.s32.f32 %v632
        %v634 = vld [vmem:[%s4] sm:$0xff]
        %v635 = vld [vmem:[%s4 + $0x8] sm:$0xff]
        %v636 = vld [vmem:[%s4 + $0x10] sm:$0xff]
        %v637 = vld [vmem:[%s4 + $0x18] sm:$0xff]
        %v638 = vld [vmem:[%s4 + $0x20] sm:$0xff]
        %v639 = vld [vmem:[%s4 + $0x28] sm:$0xff]
        %v640 = vld [vmem:[%s4 + $0x30] sm:$0xff]
        %v641 = vld [vmem:[%s4 + $0x38] sm:$0xff]
        %vm642 = vcmask 523264
        %v644 = vsel %vm642, %v633, 0
        %646 = vmatprep.subr.mxu0 0.0
        %647 = vmatpush1.msra.mxu0 0.0
        %648 = vmatprep.subr.mxu0 0.0
        %649 = vmatpush1.msra.mxu0 0.0
        %650 = vmatprep.subr.mxu0 0.0
        %651 = vmatpush1.msra.mxu0 0.0
        %652 = vmatprep.subr.mxu0 0.0
        %653 = vmatpush1.msra.mxu0 0.0
        %654 = vmatprep.subr.mxu0 0.0
        %655 = vmatpush1.msra.mxu0 0.0
        %656 = vmatprep.subr.mxu0 0.0
        %657 = vmatpush1.msra.mxu0 0.0
        %658 = vmatprep.subr.mxu0 0.0
        %659 = vmatpush1.msra.mxu0 0.0
        %660 = vmatprep.subr.mxu0 0.0
        %661 = vmatpush1.msra.mxu0 0.0
        %662 = vmatprep.subr.mxu0 0.0
        %663 = vmatpush1.msra.mxu0 %v641
        %664 = vmatprep.subr.mxu0 0.0
        %665 = vmatpush1.msra.mxu0 %v640
        %666 = vmatprep.subr.mxu0 0.0
        %667 = vmatpush1.msra.mxu0 %v639
        %668 = vmatprep.subr.mxu0 0.0
        %669 = vmatpush1.msra.mxu0 %v638
        %670 = vmatprep.subr.mxu0 0.0
        %671 = vmatpush1.msra.mxu0 %v637
        %672 = vmatprep.subr.mxu0 0.0
        %673 = vmatpush1.msra.mxu0 %v636
        %674 = vmatprep.subr.mxu0 0.0
        %675 = vmatpush1.msra.mxu0 %v635
        %676 = vmatprep.subr.mxu0 0.0
        %677 = vmatpush1.msra.mxu0 %v634
        %678 = vmatprep.subr.mxu0 0.0
        %679 = vmatpush2.msra.mxu0 0.0
        %680 = vmatprep.subr.mxu0 0.0
        %681 = vmatpush2.msra.mxu0 0.0
        %682 = vmatprep.subr.mxu0 0.0
        %683 = vmatpush2.msra.mxu0 0.0
        %684 = vmatprep.subr.mxu0 0.0
        %685 = vmatpush2.msra.mxu0 0.0
        %686 = vmatprep.subr.mxu0 0.0
        %687 = vmatpush2.msra.mxu0 0.0
        %688 = vmatprep.subr.mxu0 0.0
        %689 = vmatpush2.msra.mxu0 0.0
        %690 = vmatprep.subr.mxu0 0.0
        %691 = vmatpush2.msra.mxu0 0.0
        %692 = vmatprep.subr.mxu0 0.0
        %693 = vmatpush2.msra.mxu0 0.0
        %694 = vmatprep.subr.mxu0 0.0
        %695 = vmatpush2.msra.mxu0 0.0
        %696 = vmatprep.subr.mxu0 0.0
        %697 = vmatpush2.msra.mxu0 0.0
        %698 = vmatprep.subr.mxu0 0.0
        %699 = vmatpush2.msra.mxu0 0.0
        %700 = vmatprep.subr.mxu0 0.0
        %701 = vmatpush2.msra.mxu0 0.0
        %702 = vmatprep.subr.mxu0 0.0
        %703 = vmatpush2.msra.mxu0 0.0
        %704 = vmatprep.subr.mxu0 0.0
        %705 = vmatpush2.msra.mxu0 0.0
        %706 = vmatprep.subr.mxu0 0.0
        %707 = vmatpush2.msra.mxu0 0.0
        %708 = vmatprep.subr.mxu0 0.0
        %709 = vmatpush2.msra.mxu0 0.0
        %710 = vmatprep.mubr.f32.mxu0 0.0
        %711 = vmatmul.mubr.f32.gmra.mxu0 %v644
        %v712 = vpop.f32.mrf.mxu0
        %v713 = vadd.f32 0.0, %v712
        %v714 = vpop.f32.mrf.mxu0
        %715 = vdwg.mxu0
        %v716 = vld [vmem:[%s313] sm:$0xff]
        %vm717 = vcmp.eq.s32.totalorder %v716, 0
        %v718 = vld [vmem:[%s5] sm:$0x1]
        %v719 = vld [vmem:[%s5 + $0x1] sm:$0x1]
        %v720 = vsel %vm717, 1, 0
        %721 = vset.pattern.permute.xlu0 0
        %722 = vperm.xlu0 %721, %v720
        %v723 = vpop.permute.xlu0 %722
        %vm724 = vcmp.eq.s32.totalorder %v723, 1
        %v725 = vlaneseq
        %v726 = vshrl.u32 %v725, 7
        %v727 = vsub.s32 0, %v726
        %v728 = vrot.slane %v718, %v727
        %v729 = vlaneseq
        %v730 = vshrl.u32 %v729, 7
        %v731 = vsub.s32 0, %v730
        %v732 = vrot.slane %v719, %v731
        %v733 = vsel %vm724, %v728, %v732
        %v734 = vadd.f32 %v624, %v713
        %v735 = vadd.f32 %v734, %v733
        %736 = vadd.xlane.f32.xlu0 %v735
        %v737 = vpop.xlane.xlu0 %736
        %v738 = vrcp.pop 128.0
        %v739 = vmul.f32 %v737, %v738
        %v740 = vsub.f32 %v735, %v739
        %v741 = vmul.f32 %v740, %v740
        %742 = vadd.xlane.f32.xlu0 %v741
        %v743 = vpop.xlane.xlu0 %742
        %v744 = vmul.f32 %v743, %v738
        %v745 = vadd.f32 %v744, 1e-05
        %v746 = vrsqrt.pop %v745
        %v747 = vmul.f32 %v740, %v746
        %v748 = vld [vmem:[%s6] sm:$0x1]
        %v750 = vlaneseq
        %v751 = vshrl.u32 %v750, 7
        %v752 = vsub.s32 0, %v751
        %v753 = vrot.slane %v748, %v752
        %v755 = vmul.f32 %v747, %v753
        %v756 = vld [vmem:[%s7] sm:$0x1]
        %v758 = vlaneseq
        %v759 = vshrl.u32 %v758, 7
        %v760 = vsub.s32 0, %v759
        %v761 = vrot.slane %v756, %v760
        %v763 = vadd.f32 %v755, %v761
        %764 = vst [vmem:[%s299] sm:$0xff] %v763
        %s765 = sand.u32 %s196, 1
        %s766 = scalar_lea.sflag [#allocation7], %s765
        %s767 = sand.u32 %s196, 1
        %s768 = smul.addr %s767, 8
        %s769 = scalar_lea.vmem [#allocation6], %s768
        // Predicated region
        $region117: #{tpu_custom_call.1} parent=43 // pred_check
          %p770 = pneg %p206
        $region118: #{tpu_custom_call.1} parent=43 // pred_check_branch
          %772 = sbr.rel (%p770) target = $region120
        $region119: #{tpu_custom_call.1} parent=43 // pred_region
          %s773 = smul.u32 %s32, 2
          %s774 = sadd.s32 %s773, %s33
          %s776 = ssub.s32 128, 128
          %777 = vsyncadd %s766, %s776
          %s778 = smul.addr %s774, 128
          %s779 = scalar_lea.hbm %s8, %s778
          %s781 = sshll.u32 %s769, 4
          %s782 = int_to_ptr.vmem [resolvable:$true] %s781
          %784 = dma.vmem_to_hbm [thread:$0]  %s782, 128, %s779, %s766
        $region120: #{tpu_custom_call.1} parent=43 // pred_fallthru
          _
      $region44: #{tpu_custom_call.1} parent=5 // pred_fallthru
        _
      %p785 = scmp.le.s32.totalorder 2, %s23
      // Predicated region
      $region121: #{tpu_custom_call.1} parent=5 // pred_check
        %p786 = pneg %p785
      $region122: #{tpu_custom_call.1} parent=5 // pred_check_branch
        %788 = sbr.rel (%p786) target = $region124
      $region123: #{tpu_custom_call.1} parent=5 // pred_region
        %s789 = ssub.s32 %s23, 2
        // Predicated region
        $region125: #{tpu_custom_call.1} parent=123 // pred_check
          %p790 = pneg %p212
        $region126: #{tpu_custom_call.1} parent=123 // pred_check_branch
          %792 = sbr.rel (%p790) target = $region128
        $region127: #{tpu_custom_call.1} parent=123 // pred_region
          %s793 = sand.u32 %s197, 1
          %s794 = scalar_lea.sflag [#allocation7], %s793
          %s795 = sand.u32 %s197, 1
          %s796 = smul.addr %s795, 8
          %s797 = scalar_lea.vmem [#allocation6], %s796
          %798 = dma.done %s794, 128
        $region128: #{tpu_custom_call.1} parent=123 // pred_fallthru
          _
      $region124: #{tpu_custom_call.1} parent=5 // pred_fallthru
        _
    $region6: #{tpu_custom_call.1} parent=1 // loop_footer
      %s27 = sadd.s32 1, %s23
    $region7: #{tpu_custom_call.1} parent=1 // loop_footer_branch
      %22 = sbr.rel target = $region3
    $region8: #{tpu_custom_call.1} parent=1 // loop_exit
      _
    %799 = vsyncpa [#allocation7], 1
    %s800 = scalar_lea.sflag [#allocation7], 1
    %801 = vsyncpa %s800, 1
  %802 = vsyncmov [#allocation3]
  %s803 = vpop.sfrf %802
  %p804 = scmp.eq.s32.totalorder %s803, 0
  %p805 = pneg %p804
  %807 = shalt.err (%p805)
  %s808 = scalar_lea.sflag [#allocation3], 1
  %809 = vsyncmov %s808
  %s810 = vpop.sfrf %809
  %p811 = scmp.eq.s32.totalorder %s810, 0
  %p812 = pneg %p811
  %814 = shalt.err (%p812)

</llo_original>
